<compile_context>
chip_gen: v7x
topology: tpu7x:2x2x1
jax: 0.10.0
libtpu: 0.0.40
codegen_flags: <defaults>
</compile_context>

<pallas_src>
import functools
from typing import NamedTuple

import jax
import jax.numpy as jnp
from jax import lax
from jax.experimental import pallas as pl
from jax.experimental.pallas import tpu as pltpu


def _round_up(a: int, b: int) -> int:
    return (a + b - 1) // b * b


def _vmem_capacity_bytes() -> int:
    """Physical VMEM per TensorCore (128 MiB v5e/v6e, 64 MiB v7x)."""
    try:
        return int(pltpu.get_tpu_info().vmem_capacity_bytes)
    except Exception:
        return 64 << 20  # conservative fallback (v7x per-TC)


class SineResNNParams(NamedTuple):
    w0: jax.Array      # (din, m_p)
    b0: jax.Array      # (1, m_p)
    w_res: jax.Array   # (n_res, m_p, m_p)
    b_res: jax.Array   # (n_res, 1, m_p)
    m: int             # original (un-padded) hidden dim


def prepare_params(w0, b0, w_res, b_res) -> SineResNNParams:
    """Pad the hidden dim to a 128-lane multiple ONCE, outside the per-call
    forward path (review item: do not re-materialize padded weights per call).
    Padded lanes remain exactly zero through the whole net since sin(0)==0."""
    din, m = w0.shape
    n_res = w_res.shape[0]
    m_p = _round_up(m, 128)
    if m_p == m:
        return SineResNNParams(w0, b0.reshape(1, m), w_res,
                               b_res.reshape(n_res, 1, m), m)
    w0_p = jnp.zeros((din, m_p), w0.dtype).at[:, :m].set(w0)
    b0_p = jnp.zeros((1, m_p), b0.dtype).at[:, :m].set(b0.reshape(1, m))
    wr_p = jnp.zeros((n_res, m_p, m_p), w_res.dtype).at[:, :m, :m].set(w_res)
    br_p = jnp.zeros((n_res, 1, m_p), b_res.dtype).at[:, :, :m].set(
        b_res.reshape(n_res, 1, m))
    return SineResNNParams(w0_p, b0_p, wr_p, br_p, m)


# ----------------------------------------------------------------------------
# Kernels
# ----------------------------------------------------------------------------
def _resident_kernel(x_ref, w0_ref, b0_ref, wr_ref, br_ref, o_ref, *,
                     step: float, n_res: int):
    """Grid = (batch tile i,).  Whole weight stack is VMEM-resident (constant
    index_maps); layers run in an unrolled in-kernel loop with h in vregs.

    x_ref  : (tile_n, din)        input rows for this batch tile
    w0_ref : (din, m_p)           opening-layer weight (resident)
    b0_ref : (1, m_p)             opening-layer bias   (resident)
    wr_ref : (n_res, m_p, m_p)    all residual weights (resident)
    br_ref : (n_res, 1, m_p)      all residual biases  (resident)
    o_ref  : (tile_n, m_p)        output tile
    """
    x = x_ref[...].astype(w0_ref.dtype)                 # match MXU operand dtype
    h = jnp.sin(
        jnp.dot(x, w0_ref[...], preferred_element_type=jnp.float32)
        + b0_ref[...].astype(jnp.float32))

    wdt = wr_ref.dtype

    def body(i, h):
        w = wr_ref[i]                                   # (m_p, m_p)
        b = br_ref[i].astype(jnp.float32)               # (1, m_p)
        return h + step * jnp.sin(
            jnp.dot(h.astype(wdt), w, preferred_element_type=jnp.float32) + b)

    h = lax.fori_loop(0, n_res, body, h, unroll=True)   # static trip count
    o_ref[...] = h.astype(o_ref.dtype)


def _streamed_kernel(x_ref, w0_ref, b0_ref, wk_ref, bk_ref, o_ref, h_ref, *,
                     step: float):
    """Fallback for large weight stacks.
    Grid = (batch tile i [parallel], residual layer k [arbitrary]).

    wk_ref : (m_p, m_p)   residual weight for layer k (leading dim Squeezed)
    bk_ref : (1, m_p)     residual bias   for layer k (leading dim Squeezed)
    h_ref  : (tile_n, m_p) f32 hidden-state accumulator (VMEM scratch)
    """
    k = pl.program_id(1)

    # Opening layer once per batch tile: h = sin(x @ W0 + b0)
    @pl.when(k == 0)
    def _():
        x = x_ref[...].astype(w0_ref.dtype)
        h_ref[...] = jnp.sin(
            jnp.dot(x, w0_ref[...], preferred_element_type=jnp.float32)
            + b0_ref[...].astype(jnp.float32))

    # Residual layer k: h = h + step * sin(h @ Wk + bk)
    h = h_ref[...]
    w = wk_ref[...]
    b = bk_ref[...].astype(jnp.float32)
    h = h + step * jnp.sin(
        jnp.dot(h.astype(w.dtype), w, preferred_element_type=jnp.float32) + b)
    h_ref[...] = h

    @pl.when(k == pl.num_programs(1) - 1)
    def _():
        o_ref[...] = h.astype(o_ref.dtype)


# ----------------------------------------------------------------------------
# Wrapper
# ----------------------------------------------------------------------------
def sine_resnn_forward(x, params: SineResNNParams, *, tile_n: int | None = None,
                       force_streamed: bool = False):
    """Pallas forward.  x: (nex, d+1) -> (nex, m).  params via prepare_params()."""
    nex, din = x.shape
    w0_p, b0_p, wr_p, br_p, m = params
    m_p = w0_p.shape[1]
    n_res = wr_p.shape[0]
    n_layers = n_res + 1
    step = 1.0 / (n_layers - 1)

    xb = jnp.dtype(x.dtype).itemsize
    wb = jnp.dtype(w0_p.dtype).itemsize

    # --- generation-aware VMEM budget (v7x: 64 MiB/TC; v5e/v6e: 128 MiB) -----
    vmem_cap = _vmem_capacity_bytes()
    usable = max(min(vmem_cap - (16 << 20), 100 << 20), 24 << 20)

    weight_bytes = (wr_p.size + br_p.size + w0_p.size + b0_p.size) * wb
    # Resident mode when the whole weight stack fits ~1/3 of usable VMEM
    # (budgeted x2 below to be safe w.r.t. pipeline buffering).
    resident = (not force_streamed) and (weight_bytes <= usable // 3)

    # --- batch tile: as large as the VMEM budget allows; keep >= 2 tiles so
    #     v7x's second TensorCore gets work via the "parallel" batch axis. ----
    if tile_n is None:
        tile_n = 512
    tile_n = min(tile_n, _round_up(nex, 8))
    if nex >= 16:
        tile_n = min(tile_n, _round_up(-(-nex // 2), 8))   # n_bt >= 2
    tile_n = max(8, _round_up(tile_n, 8))

    def footprint(t: int) -> int:
        tiles = 2 * t * din * xb + 2 * t * m_p * xb        # x / out double-buffered
        if resident:
            return tiles + 2 * weight_bytes                # resident weights (x2 safety)
        return (tiles
                + t * m_p * 4                              # h scratch (f32)
                + 2 * (m_p * m_p + m_p) * wb               # streamed W_k/b_k (x2 buf)
                + 2 * (w0_p.size + b0_p.size) * wb)        # W0/b0
    while tile_n > 8 and footprint(tile_n) > usable:
        tile_n = max(8, _round_up(tile_n // 2, 8))
    # TODO(synk): for very large m on v7x in streamed mode, a column-tile grid
    # axis over W_k (or bf16 weights) would be needed; not required at demo sizes.

    nex_p = _round_up(nex, tile_n)
    n_bt = nex_p // tile_n
    x_p = x if nex_p == nex else jnp.zeros((nex_p, din), x.dtype).at[:nex].set(x)

    vmem_limit = int(min(footprint(tile_n) + (4 << 20), usable))

    flops = 2 * nex_p * m_p * (din + n_res * m_p) + 3 * nex_p * m_p * n_res
    transcendentals = nex_p * m_p * n_layers
    if resident:
        bytes_accessed = x_p.size * xb + nex_p * m_p * xb + weight_bytes
    else:
        bytes_accessed = (x_p.size * xb + nex_p * m_p * xb
                          + (w0_p.size + b0_p.size) * wb
                          + n_bt * (wr_p.size + br_p.size) * wb)
    cost = pl.CostEstimate(flops=int(flops), transcendentals=int(transcendentals),
                           bytes_accessed=int(bytes_accessed))

    if resident:
        kernel = functools.partial(_resident_kernel, step=step, n_res=n_res)
        out = pl.pallas_call(
            kernel,
            out_shape=jax.ShapeDtypeStruct((nex_p, m_p), x.dtype),
            grid_spec=pltpu.PrefetchScalarGridSpec(
                num_scalar_prefetch=0,
                grid=(n_bt,),
                in_specs=[
                    pl.BlockSpec((tile_n, din), lambda i: (i, 0)),        # x tile
                    pl.BlockSpec((din, m_p), lambda i: (0, 0)),           # W0
                    pl.BlockSpec((1, m_p), lambda i: (0, 0)),             # b0
                    pl.BlockSpec((n_res, m_p, m_p), lambda i: (0, 0, 0)), # W stack
                    pl.BlockSpec((n_res, 1, m_p), lambda i: (0, 0, 0)),   # b stack
                ],
                out_specs=pl.BlockSpec((tile_n, m_p), lambda i: (i, 0)),
            ),
            compiler_params=pltpu.CompilerParams(
                dimension_semantics=("parallel",),
                vmem_limit_bytes=vmem_limit),
            cost_estimate=cost,
        )(x_p, w0_p, b0_p, wr_p, br_p)
    else:
        kernel = functools.partial(_streamed_kernel, step=step)
        out = pl.pallas_call(
            kernel,
            out_shape=jax.ShapeDtypeStruct((nex_p, m_p), x.dtype),
            grid_spec=pltpu.PrefetchScalarGridSpec(
                num_scalar_prefetch=0,
                grid=(n_bt, n_res),
                in_specs=[
                    pl.BlockSpec((tile_n, din), lambda i, k: (i, 0)),
                    pl.BlockSpec((din, m_p), lambda i, k: (0, 0)),
                    pl.BlockSpec((1, m_p), lambda i, k: (0, 0)),
                    pl.BlockSpec((pl.Squeezed(), m_p, m_p),
                                 lambda i, k: (k, 0, 0)),                 # W_k
                    pl.BlockSpec((pl.Squeezed(), 1, m_p),
                                 lambda i, k: (k, 0, 0)),                 # b_k
                ],
                out_specs=pl.BlockSpec((tile_n, m_p), lambda i, k: (i, 0)),
                scratch_shapes=[pltpu.VMEM((tile_n, m_p), jnp.float32)],
            ),
            compiler_params=pltpu.CompilerParams(
                dimension_semantics=("parallel", "arbitrary"),
                vmem_limit_bytes=vmem_limit),
            cost_estimate=cost,
        )(x_p, w0_p, b0_p, wr_p, br_p)

    return out[:nex, :m]


# ----------------------------------------------------------------------------
# Reference & init
# ----------------------------------------------------------------------------
def sine_resnn_reference(x, w0, b0, w_res, b_res, *, n_layers: int):
    """Pure-JAX reference matching the PyTorch forward exactly."""
    step = 1.0 / (n_layers - 1)
    h = jnp.sin(x @ w0 + b0)
    for i in range(n_layers - 1):
        h = h + step * jnp.sin(h @ w_res[i] + b_res[i])
    return h


def init_params(key, d, m, n_layers, dtype=jnp.float32):
    """Deterministic init mirroring the PyTorch module's shapes.

    Layers 2..n_layers-1 are deepcopies of layer 1 at __init__ time, so all
    residual layers share identical initial weights (replicated here).
    Weights stored (in, out) so the kernel computes x @ W + b.
    """
    din = d + 1
    k0w, k0b, k1w, k1b = jax.random.split(key, 4)
    bound0 = 1.0 / jnp.sqrt(din)
    bound1 = 1.0 / jnp.sqrt(m)
    w0 = jax.random.uniform(k0w, (din, m), dtype, -bound0, bound0)
    b0 = jax.random.uniform(k0b, (m,), dtype, -bound0, bound0)
    w1 = jax.random.uniform(k1w, (m, m), dtype, -bound1, bound1)
    b1 = jax.random.uniform(k1b, (m,), dtype, -bound1, bound1)
    n_res = n_layers - 1
    w_res = jnp.asarray(jnp.broadcast_to(w1, (n_res, m, m)))   # deepcopy semantics
    b_res = jnp.asarray(jnp.broadcast_to(b1, (n_res, m)))
    return w0, b0, w_res, b_res


if __name__ == "__main__":
    d = 3            # space dim -> inputs are d+1 = 4 (space-time)
    m = 32           # hidden dim (padded to 128 lanes once in prepare_params)
    n_layers = 4     # >= 2  -> 3 residual layers
    nex = 40         # batch of examples

    key = jax.random.PRNGKey(0)
    kx, kp = jax.random.split(key)
    x = jax.random.normal(kx, (nex, d + 1), jnp.float32)
    w0, b0, w_res, b_res = init_params(kp, d, m, n_layers)
    ref = sine_resnn_reference(x, w0, b0, w_res, b_res, n_layers=n_layers)

    # 1) f32 weights, resident-weight path (default): exact vs reference.
    params_f32 = prepare_params(w0, b0, w_res, b_res)
    out = jax.block_until_ready(sine_resnn_forward(x, params_f32))
    assert out.shape == (nex, m)
    assert jnp.allclose(out, ref, atol=1e-5, rtol=1e-5), "f32 resident mismatch"

    # 2) f32 weights, streamed-layer fallback path (forced): exact vs reference.
    out_s = jax.block_until_ready(
        sine_resnn_forward(x, params_f32, tile_n=16, force_streamed=True))
    assert out_s.shape == (nex, m)
    assert jnp.allclose(out_s, ref, atol=1e-5, rtol=1e-5), "f32 streamed mismatch"

    # 3) bf16 weights (recommended storage on v6e/v7x): bf16 MXU operands,
    #    f32 accumulation & elementwise; looser tolerance for bf16 rounding.
    params_bf16 = prepare_params(w0.astype(jnp.bfloat16), b0.astype(jnp.bfloat16),
                                 w_res.astype(jnp.bfloat16),
                                 b_res.astype(jnp.bfloat16))
    out_b = jax.block_until_ready(sine_resnn_forward(x, params_bf16))
    ref_b = sine_resnn_reference(
        x, w0.astype(jnp.bfloat16).astype(jnp.float32),
        b0.astype(jnp.bfloat16).astype(jnp.float32),
        w_res.astype(jnp.bfloat16).astype(jnp.float32),
        b_res.astype(jnp.bfloat16).astype(jnp.float32), n_layers=n_layers)
    assert out_b.shape == (nex, m)
    assert jnp.allclose(out_b, ref_b, atol=2e-1, rtol=2e-1), "bf16 mismatch"

    print("KERNEL_OK")
</pallas_src>

<mosaic_0001>
module attributes {stable_mosaic.version = 11 : i64} {
  func.func @_resident_kernel(%arg0: i32, %arg1: memref<24x4xf32, #tpu.memory_space<vmem>>, %arg2: memref<4x128xf32, #tpu.memory_space<vmem>>, %arg3: memref<1x128xf32, #tpu.memory_space<vmem>>, %arg4: memref<3x128x128xf32, #tpu.memory_space<vmem>>, %arg5: memref<3x1x128xf32, #tpu.memory_space<vmem>>, %arg6: memref<24x128xf32, #tpu.memory_space<vmem>>) attributes {dimension_semantics = [#tpu.dimension_semantics<parallel>], iteration_bounds = array<i64: 2>, scalar_prefetch = 0 : i64, scratch_operands = 0 : i64, tpu.core_type = #tpu.core_type<tc>, window_params = [{transform_indices = @transform_0, window_bounds = array<i64: 24, 4>}, {pipeline_mode = #tpu.pipeline_mode<synchronous>, transform_indices = @transform_1, window_bounds = array<i64: 4, 128>}, {pipeline_mode = #tpu.pipeline_mode<synchronous>, transform_indices = @transform_2, window_bounds = array<i64: 1, 128>}, {pipeline_mode = #tpu.pipeline_mode<synchronous>, transform_indices = @transform_3, window_bounds = array<i64: 3, 128, 128>}, {pipeline_mode = #tpu.pipeline_mode<synchronous>, transform_indices = @transform_4, window_bounds = array<i64: 3, 1, 128>}, {transform_indices = @transform_5, window_bounds = array<i64: 24, 128>}]} {
    %c0 = arith.constant 0 : index
    %c0_0 = arith.constant 0 : index
    %0 = vector.load %arg1[%c0, %c0_0] : memref<24x4xf32, #tpu.memory_space<vmem>>, vector<24x4xf32>
    %c0_1 = arith.constant 0 : index
    %c0_2 = arith.constant 0 : index
    %1 = vector.load %arg2[%c0_1, %c0_2] : memref<4x128xf32, #tpu.memory_space<vmem>>, vector<4x128xf32>
    %cst = arith.constant dense<0.000000e+00> : vector<24x128xf32>
    %2 = tpu.matmul %0, %1, %cst {dimension_numbers = #tpu.dot_dimension_numbers<[1], [0], [0], [1], [0, 0, 1, 1], [], []>} : vector<24x4xf32>, vector<4x128xf32>, vector<24x128xf32> -> vector<24x128xf32>
    %c0_3 = arith.constant 0 : index
    %c0_4 = arith.constant 0 : index
    %3 = vector.load %arg3[%c0_3, %c0_4] : memref<1x128xf32, #tpu.memory_space<vmem>>, vector<1x128xf32>
    %4 = vector.broadcast %3 : vector<1x128xf32> to vector<24x128xf32>
    %5 = arith.addf %2, %4 : vector<24x128xf32>
    %6 = math.sin %5 : vector<24x128xf32>
    %c0_i32 = arith.constant 0 : i32
    %7 = arith.index_cast %c0_i32 : i32 to index
    %c0_5 = arith.constant 0 : index
    %c0_6 = arith.constant 0 : index
    %8 = vector.load %arg4[%7, %c0_5, %c0_6] : memref<3x128x128xf32, #tpu.memory_space<vmem>>, vector<1x128x128xf32>
    %9 = vector.shape_cast %8 : vector<1x128x128xf32> to vector<128x128xf32>
    %10 = arith.index_cast %c0_i32 : i32 to index
    %c0_7 = arith.constant 0 : index
    %c0_8 = arith.constant 0 : index
    %11 = vector.load %arg5[%10, %c0_7, %c0_8] : memref<3x1x128xf32, #tpu.memory_space<vmem>>, vector<1x1x128xf32>
    %12 = vector.shape_cast %11 : vector<1x1x128xf32> to vector<1x128xf32>
    %cst_9 = arith.constant dense<0.000000e+00> : vector<24x128xf32>
    %13 = tpu.matmul %6, %9, %cst_9 {dimension_numbers = #tpu.dot_dimension_numbers<[1], [0], [0], [1], [0, 0, 1, 1], [], []>} : vector<24x128xf32>, vector<128x128xf32>, vector<24x128xf32> -> vector<24x128xf32>
    %14 = vector.broadcast %12 : vector<1x128xf32> to vector<24x128xf32>
    %15 = arith.addf %13, %14 : vector<24x128xf32>
    %16 = math.sin %15 : vector<24x128xf32>
    %cst_10 = arith.constant 0.333333343 : f32
    %17 = vector.broadcast %cst_10 : f32 to vector<24x128xf32>
    %18 = arith.mulf %17, %16 : vector<24x128xf32>
    %19 = arith.addf %6, %18 : vector<24x128xf32>
    %c1_i32 = arith.constant 1 : i32
    %20 = arith.index_cast %c1_i32 : i32 to index
    %c0_11 = arith.constant 0 : index
    %c0_12 = arith.constant 0 : index
    %21 = vector.load %arg4[%20, %c0_11, %c0_12] : memref<3x128x128xf32, #tpu.memory_space<vmem>>, vector<1x128x128xf32>
    %22 = vector.shape_cast %21 : vector<1x128x128xf32> to vector<128x128xf32>
    %23 = arith.index_cast %c1_i32 : i32 to index
    %c0_13 = arith.constant 0 : index
    %c0_14 = arith.constant 0 : index
    %24 = vector.load %arg5[%23, %c0_13, %c0_14] : memref<3x1x128xf32, #tpu.memory_space<vmem>>, vector<1x1x128xf32>
    %25 = vector.shape_cast %24 : vector<1x1x128xf32> to vector<1x128xf32>
    %cst_15 = arith.constant dense<0.000000e+00> : vector<24x128xf32>
    %26 = tpu.matmul %19, %22, %cst_15 {dimension_numbers = #tpu.dot_dimension_numbers<[1], [0], [0], [1], [0, 0, 1, 1], [], []>} : vector<24x128xf32>, vector<128x128xf32>, vector<24x128xf32> -> vector<24x128xf32>
    %27 = vector.broadcast %25 : vector<1x128xf32> to vector<24x128xf32>
    %28 = arith.addf %26, %27 : vector<24x128xf32>
    %29 = math.sin %28 : vector<24x128xf32>
    %cst_16 = arith.constant 0.333333343 : f32
    %30 = vector.broadcast %cst_16 : f32 to vector<24x128xf32>
    %31 = arith.mulf %30, %29 : vector<24x128xf32>
    %32 = arith.addf %19, %31 : vector<24x128xf32>
    %c2_i32 = arith.constant 2 : i32
    %33 = arith.index_cast %c2_i32 : i32 to index
    %c0_17 = arith.constant 0 : index
    %c0_18 = arith.constant 0 : index
    %34 = vector.load %arg4[%33, %c0_17, %c0_18] : memref<3x128x128xf32, #tpu.memory_space<vmem>>, vector<1x128x128xf32>
    %35 = vector.shape_cast %34 : vector<1x128x128xf32> to vector<128x128xf32>
    %36 = arith.index_cast %c2_i32 : i32 to index
    %c0_19 = arith.constant 0 : index
    %c0_20 = arith.constant 0 : index
    %37 = vector.load %arg5[%36, %c0_19, %c0_20] : memref<3x1x128xf32, #tpu.memory_space<vmem>>, vector<1x1x128xf32>
    %38 = vector.shape_cast %37 : vector<1x1x128xf32> to vector<1x128xf32>
    %cst_21 = arith.constant dense<0.000000e+00> : vector<24x128xf32>
    %39 = tpu.matmul %32, %35, %cst_21 {dimension_numbers = #tpu.dot_dimension_numbers<[1], [0], [0], [1], [0, 0, 1, 1], [], []>} : vector<24x128xf32>, vector<128x128xf32>, vector<24x128xf32> -> vector<24x128xf32>
    %40 = vector.broadcast %38 : vector<1x128xf32> to vector<24x128xf32>
    %41 = arith.addf %39, %40 : vector<24x128xf32>
    %42 = math.sin %41 : vector<24x128xf32>
    %cst_22 = arith.constant 0.333333343 : f32
    %43 = vector.broadcast %cst_22 : f32 to vector<24x128xf32>
    %44 = arith.mulf %43, %42 : vector<24x128xf32>
    %45 = arith.addf %32, %44 : vector<24x128xf32>
    %c3_i32 = arith.constant 3 : i32
    %c0_23 = arith.constant 0 : index
    %c0_24 = arith.constant 0 : index
    %46 = vector.load %arg6[%c0_23, %c0_24] : memref<24x128xf32, #tpu.memory_space<vmem>>, vector<24x128xf32>
    tpu.vector_store %arg6[%c0_23, %c0_24], %45 {strides = array<i32>} : memref<24x128xf32, #tpu.memory_space<vmem>>, vector<24x128xf32>,
    return
  }
  func.func @transform_0(%arg0: i32) -> (i32, i32) {
    %c0_i32 = arith.constant 0 : i32
    %c0_i32_0 = arith.constant 0 : i32
    return %arg0, %c0_i32 : i32, i32
  }
  func.func @transform_1(%arg0: i32) -> (i32, i32) {
    %c0_i32 = arith.constant 0 : i32
    %c0_i32_0 = arith.constant 0 : i32
    %c0_i32_1 = arith.constant 0 : i32
    return %c0_i32, %c0_i32_0 : i32, i32
  }
  func.func @transform_2(%arg0: i32) -> (i32, i32) {
    %c0_i32 = arith.constant 0 : i32
    %c0_i32_0 = arith.constant 0 : i32
    %c0_i32_1 = arith.constant 0 : i32
    return %c0_i32, %c0_i32_0 : i32, i32
  }
  func.func @transform_3(%arg0: i32) -> (i32, i32, i32) {
    %c0_i32 = arith.constant 0 : i32
    %c0_i32_0 = arith.constant 0 : i32
    %c0_i32_1 = arith.constant 0 : i32
    %c0_i32_2 = arith.constant 0 : i32
    return %c0_i32, %c0_i32_0, %c0_i32_1 : i32, i32, i32
  }
  func.func @transform_4(%arg0: i32) -> (i32, i32, i32) {
    %c0_i32 = arith.constant 0 : i32
    %c0_i32_0 = arith.constant 0 : i32
    %c0_i32_1 = arith.constant 0 : i32
    %c0_i32_2 = arith.constant 0 : i32
    return %c0_i32, %c0_i32_0, %c0_i32_1 : i32, i32, i32
  }
  func.func @transform_5(%arg0: i32) -> (i32, i32) {
    %c0_i32 = arith.constant 0 : i32
    %c0_i32_0 = arith.constant 0 : i32
    return %arg0, %c0_i32 : i32, i32
  }
}

</mosaic_0001>

<llo_original>
// kernel: tpu_custom_call.1
$region0: #{tpu_custom_call.1}
  #allocation0 [shape = 'u32[]', space=smem, size = 0x4, offset = 0x4, fixed_abs, tag = 'smem constant byte address 0x4 - core index']
  #allocation1 [shape = 'u32[144,128]{1,0:T(1,128)}', space=vmem, size = 0x12000, scoped, tag = 'internal scratch']
  %s0 = inlined_call_operand.vmem [shape: f32[48,4], index: 0, kind: input, shape index: {}]
  %s1 = inlined_call_operand.vmem [shape: f32[4,128], index: 1, kind: input, shape index: {}]
  %s2 = inlined_call_operand.vmem [shape: f32[1,128], index: 2, kind: input, shape index: {}]
  %s3 = inlined_call_operand.hbm [shape: f32[3,128,128], index: 3, kind: input, shape index: {}]
  %s4 = inlined_call_operand.vmem [shape: f32[3,1,128], index: 4, kind: input, shape index: {}]
  %s5 = inlined_call_operand.hbm [shape: f32[48,128], index: 5, kind: output, shape index: {}]
  %s6 = sld [smem:[#allocation0]]
  $region57: #{tpu_custom_call.1} parent=0
    _
  %s8 = ssub.s32 1, %s6
  %s9 = scalar_select 0, %s8, %s6
  $region1: #{tpu_custom_call.1} parent=0
    #allocation2 [shape = 'u8[196608]{0}', space=vmem, size = 0x30000, scoped, tag = 'input window, operand 3, single buffered']
    #allocation3 [shape = 's32[2]{0}', space=sflag, size = 0x8, scoped, tag = 'scoped memory for tpu_custom_call.1']
    #allocation4 [shape = 's32[2]{0}', space=sflag, size = 0x8, scoped, tag = 'scoped memory for tpu_custom_call.1']
    #allocation5 [shape = 'u8[24576]{0}', space=vmem, size = 0x6000, scoped, tag = 'output window, operand 0']
    %10 = vsyncpa [#allocation3], 0
    %11 = vsyncpa [#allocation4], 0
    %s12 = scalar_lea.sflag [#allocation4], 1
    %13 = vsyncpa %s12, 0
    loop: start=0, step=1, limit=4
    $region2: #{tpu_custom_call.1} parent=1 // loop_pre_header
      _
    $region3: #{tpu_custom_call.1} parent=1 // loop_header
      %s15 = sphi 0, %s19
      %p16 = scmp.ge.s32.totalorder %s15, 4
      %s25 = sphi 0, %s27
      %s28 = sphi 0, %s25
      %s29 = sphi 0, %s28
      %s45 = sphi 0, %s29
      %s49 = sphi 0, %s49
      %s51 = sphi 0, %s49
      %s52 = sphi 0, %s51
      %s66 = sphi 0, %s52
      %s70 = sphi 0, %s70
      %s72 = sphi 0, %s70
      %s73 = sphi 0, %s72
      %s87 = sphi 0, %s73
      %s91 = sphi 0, %s91
      %s93 = sphi 0, %s91
      %s94 = sphi 0, %s93
      %s108 = sphi 0, %s94
      %s112 = sphi 0, %s112
      %s114 = sphi 0, %s112
      %s115 = sphi 0, %s114
      %s129 = sphi 0, %s115
      %s135 = sphi 0, %s137
      %s138 = sphi 0, %s135
      %s139 = sphi 0, %s138
      %s155 = sphi 0, %s139
    $region4: #{tpu_custom_call.1} parent=1 // loop_header_branch
      %18 = sbr.rel (%p16) target = $region8
    $region5: #{tpu_custom_call.1} parent=1 // loop_body
      %s20 = ssub.s32 %s15, 1
      %s21 = ssub.s32 %s15, 2
      %s22 = sadd.s32 %s15, 1
      %s23 = ssub.s32 %s15, %s22
      %p24 = scmp.eq.s32.totalorder %s23, 0
      %s26 = sadd.s32 %s25, 1
      %s27 = scalar_select %p24, %s25, %s26
      %p30 = pneg %p24
      %p31 = scmp.eq.s32.totalorder %s15, 1
      %p32 = por %p30, %p31
      %p33 = scmp.ne.s32.totalorder %s25, %s28
      %p34 = scmp.eq.s32.totalorder %s15, 0
      %p35 = por %p33, %p34
      %p36 = scmp.ne.s32.totalorder %s25, %s28
      %p37 = scmp.eq.s32.totalorder %s20, 1
      %p38 = por %p36, %p37
      %p39 = scmp.ne.s32.totalorder %s28, %s29
      %p40 = scmp.eq.s32.totalorder %s20, 0
      %p41 = por %p39, %p40
      %p42 = scmp.ne.s32.totalorder %s28, %s29
      %p43 = scmp.eq.s32.totalorder %s21, 1
      %p44 = por %p42, %p43
      %p46 = scmp.ne.s32.totalorder %s29, %s45
      %p47 = scmp.eq.s32.totalorder %s21, 0
      %p48 = por %p46, %p47
      %s50 = sadd.s32 %s49, 1
      %p53 = scmp.eq.s32.totalorder %s15, 1
      %p54 = scmp.ne.s32.totalorder %s49, %s51
      %p55 = scmp.eq.s32.totalorder %s15, 0
      %p56 = por %p54, %p55
      %p57 = scmp.ne.s32.totalorder %s49, %s51
      %p58 = scmp.eq.s32.totalorder %s20, 1
      %p59 = por %p57, %p58
      %p60 = scmp.ne.s32.totalorder %s51, %s52
      %p61 = scmp.eq.s32.totalorder %s20, 0
      %p62 = por %p60, %p61
      %p63 = scmp.ne.s32.totalorder %s51, %s52
      %p64 = scmp.eq.s32.totalorder %s21, 1
      %p65 = por %p63, %p64
      %p67 = scmp.ne.s32.totalorder %s52, %s66
      %p68 = scmp.eq.s32.totalorder %s21, 0
      %p69 = por %p67, %p68
      %s71 = sadd.s32 %s70, 1
      %p74 = scmp.eq.s32.totalorder %s15, 1
      %p75 = scmp.ne.s32.totalorder %s70, %s72
      %p76 = scmp.eq.s32.totalorder %s15, 0
      %p77 = por %p75, %p76
      %p78 = scmp.ne.s32.totalorder %s70, %s72
      %p79 = scmp.eq.s32.totalorder %s20, 1
      %p80 = por %p78, %p79
      %p81 = scmp.ne.s32.totalorder %s72, %s73
      %p82 = scmp.eq.s32.totalorder %s20, 0
      %p83 = por %p81, %p82
      %p84 = scmp.ne.s32.totalorder %s72, %s73
      %p85 = scmp.eq.s32.totalorder %s21, 1
      %p86 = por %p84, %p85
      %p88 = scmp.ne.s32.totalorder %s73, %s87
      %p89 = scmp.eq.s32.totalorder %s21, 0
      %p90 = por %p88, %p89
      %s92 = sadd.s32 %s91, 1
      %p95 = scmp.eq.s32.totalorder %s15, 1
      %p96 = scmp.ne.s32.totalorder %s91, %s93
      %p97 = scmp.eq.s32.totalorder %s15, 0
      %p98 = por %p96, %p97
      %p99 = scmp.ne.s32.totalorder %s91, %s93
      %p100 = scmp.eq.s32.totalorder %s20, 1
      %p101 = por %p99, %p100
      %p102 = scmp.ne.s32.totalorder %s93, %s94
      %p103 = scmp.eq.s32.totalorder %s20, 0
      %p104 = por %p102, %p103
      %p105 = scmp.ne.s32.totalorder %s93, %s94
      %p106 = scmp.eq.s32.totalorder %s21, 1
      %p107 = por %p105, %p106
      %p109 = scmp.ne.s32.totalorder %s94, %s108
      %p110 = scmp.eq.s32.totalorder %s21, 0
      %p111 = por %p109, %p110
      %s113 = sadd.s32 %s112, 1
      %p116 = scmp.eq.s32.totalorder %s15, 1
      %p117 = scmp.ne.s32.totalorder %s112, %s114
      %p118 = scmp.eq.s32.totalorder %s15, 0
      %p119 = por %p117, %p118
      %p120 = scmp.ne.s32.totalorder %s112, %s114
      %p121 = scmp.eq.s32.totalorder %s20, 1
      %p122 = por %p120, %p121
      %p123 = scmp.ne.s32.totalorder %s114, %s115
      %p124 = scmp.eq.s32.totalorder %s20, 0
      %p125 = por %p123, %p124
      %p126 = scmp.ne.s32.totalorder %s114, %s115
      %p127 = scmp.eq.s32.totalorder %s21, 1
      %p128 = por %p126, %p127
      %p130 = scmp.ne.s32.totalorder %s115, %s129
      %p131 = scmp.eq.s32.totalorder %s21, 0
      %p132 = por %p130, %p131
      %s133 = ssub.s32 %s15, %s22
      %p134 = scmp.eq.s32.totalorder %s133, 0
      %s136 = sadd.s32 %s135, 1
      %s137 = scalar_select %p134, %s135, %s136
      %p140 = pneg %p134
      %p141 = scmp.eq.s32.totalorder %s15, 1
      %p142 = por %p140, %p141
      %p143 = scmp.ne.s32.totalorder %s135, %s138
      %p144 = scmp.eq.s32.totalorder %s15, 0
      %p145 = por %p143, %p144
      %p146 = scmp.ne.s32.totalorder %s135, %s138
      %p147 = scmp.eq.s32.totalorder %s20, 1
      %p148 = por %p146, %p147
      %p149 = scmp.ne.s32.totalorder %s138, %s139
      %p150 = scmp.eq.s32.totalorder %s20, 0
      %p151 = por %p149, %p150
      %p152 = scmp.ne.s32.totalorder %s138, %s139
      %p153 = scmp.eq.s32.totalorder %s21, 1
      %p154 = por %p152, %p153
      %p156 = scmp.ne.s32.totalorder %s139, %s155
      %p157 = scmp.eq.s32.totalorder %s21, 0
      %p158 = por %p156, %p157
      %p159 = scmp.le.s32.totalorder 1, %s15
      %p160 = scmp.lt.s32.totalorder %s15, 3
      %p161 = pnand %p159, %p160
      %p162 = pneg %p161
      // Predicated region
      $region9: #{tpu_custom_call.1} parent=5 // pred_check
        _
      $region10: #{tpu_custom_call.1} parent=5 // pred_check_branch
        %164 = sbr.rel (%p161) target = $region12
      $region11: #{tpu_custom_call.1} parent=5 // pred_region
        %s165 = ssub.s32 %s15, 1
        // Predicated region
        $region13: #{tpu_custom_call.1} parent=11 // pred_check
          %p166 = pneg %p62
        $region14: #{tpu_custom_call.1} parent=11 // pred_check_branch
          %168 = sbr.rel (%p166) target = $region16
        $region15: #{tpu_custom_call.1} parent=11 // pred_region
          _
        $region16: #{tpu_custom_call.1} parent=11 // pred_fallthru
          _
        // Predicated region
        $region17: #{tpu_custom_call.1} parent=11 // pred_check
          %p169 = pneg %p83
        $region18: #{tpu_custom_call.1} parent=11 // pred_check_branch
          %171 = sbr.rel (%p169) target = $region20
        $region19: #{tpu_custom_call.1} parent=11 // pred_region
          _
        $region20: #{tpu_custom_call.1} parent=11 // pred_fallthru
          _
        // Predicated region
        $region21: #{tpu_custom_call.1} parent=11 // pred_check
          %p172 = pneg %p104
        $region22: #{tpu_custom_call.1} parent=11 // pred_check_branch
          %174 = sbr.rel (%p172) target = $region24
        $region23: #{tpu_custom_call.1} parent=11 // pred_region
          %s176 = ssub.s32 6144, 6144
          %177 = vsyncadd [#allocation3], %s176
          %s178 = sshll.u32 [#allocation2], 4
          %s179 = int_to_ptr.vmem [resolvable:$true] %s178
          %184 = dma.hbm_to_vmem [thread:$0]  %s3, 6144, %s179, [#allocation3], 128, 128, 8
        $region24: #{tpu_custom_call.1} parent=11 // pred_fallthru
          _
        // Predicated region
        $region25: #{tpu_custom_call.1} parent=11 // pred_check
          %p185 = pneg %p125
        $region26: #{tpu_custom_call.1} parent=11 // pred_check_branch
          %187 = sbr.rel (%p185) target = $region28
        $region27: #{tpu_custom_call.1} parent=11 // pred_region
          _
        $region28: #{tpu_custom_call.1} parent=11 // pred_fallthru
          _
      $region12: #{tpu_custom_call.1} parent=5 // pred_fallthru
        _
      %p188 = scmp.lt.s32.totalorder %s15, 2
      // Predicated region
      $region29: #{tpu_custom_call.1} parent=5 // pred_check
        %p189 = pneg %p188
      $region30: #{tpu_custom_call.1} parent=5 // pred_check_branch
        %191 = sbr.rel (%p189) target = $region32
      $region31: #{tpu_custom_call.1} parent=5 // pred_region
        // Predicated region
        $region33: #{tpu_custom_call.1} parent=31 // pred_check
          %p192 = pneg %p35
        $region34: #{tpu_custom_call.1} parent=31 // pred_check_branch
          %194 = sbr.rel (%p192) target = $region36
        $region35: #{tpu_custom_call.1} parent=31 // pred_region
          %s195 = smul.u32 3, %s15
          %p196 = scmp.lt.s32.totalorder %s195, 5
          %s197 = scalar_select %p196, %s195, 5
          %s198 = smul.addr %s197, 8
          %s199 = scalar_lea.vmem %s0, %s198
          %s200 = smul.u32 3, %s15
        $region36: #{tpu_custom_call.1} parent=31 // pred_fallthru
          _
      $region32: #{tpu_custom_call.1} parent=5 // pred_fallthru
        _
      %p201 = scmp.le.s32.totalorder 1, %s15
      %p202 = scmp.lt.s32.totalorder %s15, 3
      %p203 = pnand %p201, %p202
      %p204 = pneg %p203
      // Predicated region
      $region37: #{tpu_custom_call.1} parent=5 // pred_check
        _
      $region38: #{tpu_custom_call.1} parent=5 // pred_check_branch
        %206 = sbr.rel (%p203) target = $region40
      $region39: #{tpu_custom_call.1} parent=5 // pred_region
        %s207 = ssub.s32 %s15, 1
        // Predicated region
        $region41: #{tpu_custom_call.1} parent=39 // pred_check
          %p208 = pneg %p104
        $region42: #{tpu_custom_call.1} parent=39 // pred_check_branch
          %210 = sbr.rel (%p208) target = $region44
        $region43: #{tpu_custom_call.1} parent=39 // pred_region
          %211 = dma.done [#allocation3], 6144
        $region44: #{tpu_custom_call.1} parent=39 // pred_fallthru
          _
        %s212 = smul.u32 3, %s20
        %p213 = scmp.lt.s32.totalorder %s212, 5
        %s214 = scalar_select %p213, %s212, 5
        %s215 = smul.addr %s214, 8
        %s216 = scalar_lea.vmem %s0, %s215
        %p217 = pneg %p41
        %p218 = pneg %p38
        %p219 = pneg %p62
        %p220 = pneg %p59
        %p221 = pneg %p83
        %p222 = pneg %p80
        %p223 = pneg %p104
        %p224 = pneg %p101
        %p225 = pneg %p125
        %p226 = pneg %p122
        %p227 = pneg %p151
        %p228 = pneg %p148
        %s229 = sand.u32 %s138, 1
        %s230 = scalar_lea.sflag [#allocation4], %s229
        %s231 = sand.u32 %s138, 1
        %s232 = smul.addr %s231, 24
        %s233 = scalar_lea.vmem [#allocation5], %s232
        %s234 = smul.u32 3, %s20
        %p235 = scmp.lt.s32.totalorder %s234, 5
        %s236 = scalar_select %p235, %s234, 5
        %s237 = smul.addr %s236, 8
        %s238 = scalar_lea.vmem %s0, %s237
        %s239 = smul.u32 3, %s20
        %s240 = smul.u32 3, %s20
        %v241 = vld [vmem:[%s238] sm:$0xff]
        %v242 = vld [vmem:[%s238 + $0x8] sm:$0xff]
        %v243 = vld [vmem:[%s238 + $0x10] sm:$0xff]
        %v244 = vld [vmem:[%s1] sm:$0xf]
        %v245 = vld [vmem:[%s2] sm:$0x1]
        %v247 = vlaneseq
        %v248 = vshrl.u32 %v247, 7
        %v249 = vsub.s32 0, %v248
        %v250 = vrot.slane %v245, %v249
        %vm252 = vcmask 31744
        %v254 = vsel %vm252, %v241, 0
        %v257 = vsel %vm252, %v242, 0
        %v260 = vsel %vm252, %v243, 0
        %vm262 = vcmask 1043456
        %v264 = vsel %vm262, %v244, 0
        %266 = vmatprep.subr.mxu0 0.0
        %267 = vmatpush1.msra.mxu0 %v264
        %268 = vmatprep.subr.mxu0 0.0
        %269 = vmatpush1.msra.mxu0 0.0
        %270 = vmatprep.subr.mxu0 0.0
        %271 = vmatpush1.msra.mxu0 0.0
        %272 = vmatprep.subr.mxu0 0.0
        %273 = vmatpush1.msra.mxu0 0.0
        %274 = vmatprep.subr.mxu0 0.0
        %275 = vmatpush1.msra.mxu0 0.0
        %276 = vmatprep.subr.mxu0 0.0
        %277 = vmatpush1.msra.mxu0 0.0
        %278 = vmatprep.subr.mxu0 0.0
        %279 = vmatpush1.msra.mxu0 0.0
        %280 = vmatprep.subr.mxu0 0.0
        %281 = vmatpush1.msra.mxu0 0.0
        %282 = vmatprep.subr.mxu0 0.0
        %283 = vmatpush1.msra.mxu0 0.0
        %284 = vmatprep.subr.mxu0 0.0
        %285 = vmatpush1.msra.mxu0 0.0
        %286 = vmatprep.subr.mxu0 0.0
        %287 = vmatpush1.msra.mxu0 0.0
        %288 = vmatprep.subr.mxu0 0.0
        %289 = vmatpush1.msra.mxu0 0.0
        %290 = vmatprep.subr.mxu0 0.0
        %291 = vmatpush1.msra.mxu0 0.0
        %292 = vmatprep.subr.mxu0 0.0
        %293 = vmatpush1.msra.mxu0 0.0
        %294 = vmatprep.subr.mxu0 0.0
        %295 = vmatpush1.msra.mxu0 0.0
        %296 = vmatprep.subr.mxu0 0.0
        %297 = vmatpush1.msra.mxu0 0.0
        %298 = vmatprep.subr.mxu0 0.0
        %299 = vmatpush1.msra.mxu0 0.0
        %300 = vmatprep.subr.mxu0 0.0
        %301 = vmatpush1.msra.mxu0 0.0
        %302 = vmatprep.subr.mxu0 0.0
        %303 = vmatpush1.msra.mxu0 0.0
        %304 = vmatprep.subr.mxu0 0.0
        %305 = vmatpush1.msra.mxu0 0.0
        %306 = vmatprep.subr.mxu0 0.0
        %307 = vmatpush1.msra.mxu0 0.0
        %308 = vmatprep.subr.mxu0 0.0
        %309 = vmatpush1.msra.mxu0 0.0
        %310 = vmatprep.subr.mxu0 0.0
        %311 = vmatpush1.msra.mxu0 0.0
        %312 = vmatprep.subr.mxu0 0.0
        %313 = vmatpush1.msra.mxu0 0.0
        %314 = vmatprep.subr.mxu0 0.0
        %315 = vmatpush1.msra.mxu0 0.0
        %316 = vmatprep.subr.mxu0 0.0
        %317 = vmatpush1.msra.mxu0 0.0
        %318 = vmatprep.subr.mxu0 0.0
        %319 = vmatpush1.msra.mxu0 0.0
        %320 = vmatprep.subr.mxu0 0.0
        %321 = vmatpush1.msra.mxu0 0.0
        %322 = vmatprep.subr.mxu0 0.0
        %323 = vmatpush1.msra.mxu0 0.0
        %324 = vmatprep.subr.mxu0 0.0
        %325 = vmatpush1.msra.mxu0 0.0
        %326 = vmatprep.subr.mxu0 0.0
        %327 = vmatpush1.msra.mxu0 0.0
        %328 = vmatprep.subr.mxu0 0.0
        %329 = vmatpush1.msra.mxu0 0.0
        %330 = vmatprep.mubr.f32.mxu0 0.0
        %331 = vmatmul.mubr.f32.gmra.mrb[0].mxu0 %v254
        %v332 = vpop.f32.mrb[0].mxu0
        %v333 = vadd.f32 %v250, %v332
        %v334 = vpop.f32.mrb[0].mxu0
        %335 = vmatprep.mubr.f32.mxu0 0.0
        %336 = vmatmul.mubr.f32.gmra.mrb[0].mxu0 %v257
        %v337 = vpop.f32.mrb[0].mxu0
        %v338 = vadd.f32 %v250, %v337
        %v339 = vpop.f32.mrb[0].mxu0
        %340 = vmatprep.mubr.f32.mxu0 0.0
        %341 = vmatmul.mubr.f32.gmra.mrb[0].mxu0 %v260
        %v342 = vpop.f32.mrb[0].mxu0
        %v343 = vadd.f32 %v250, %v342
        %v344 = vpop.f32.mrb[0].mxu0
        %345 = vdwg.mxu0
        %v346 = vand.u32 2147483647, %v333
        %vm347 = vcmp.le.f32.partialorder %v346, 0.7853982
        %vm348 = vcmp.lt.s32.totalorder %v333, 0
        %v349 = vand.u32 %v333, 2139095040
        %v350 = vshrl.u32 %v349, 23
        %v351 = vsub.s32 %v350, 127
        %v352 = vand.u32 2147483647, %v333
        %v353 = vand.u32 %v352, 8388607
        %v354 = vor.u32 %v353, 8388608
        %v355 = vsub.s32 0, %v354
        %v356 = vadd.s32 %v351, 1
        %vm357 = vcmp.gt.s32.totalorder %v356, 0
        %v358 = vsel %vm357, %v356, 0
        %v359 = vshrl.u32 %v358, 5
        %v360 = vand.u32 %v358, 31
        %v361 = vsub.s32 32, %v360
        %v362 = vshrl.u32 683565275, %v361
        %v363 = vshll.u32 683565275, %v360
        %v364 = vshrl.u32 2475754826, %v361
        %v365 = vor.u32 %v363, %v364
        %v366 = vshll.u32 2475754826, %v360
        %v367 = vshrl.u32 2131351028, %v361
        %v368 = vor.u32 %v366, %v367
        %v369 = vshll.u32 2131351028, %v360
        %v370 = vshrl.u32 2102212464, %v361
        %v371 = vor.u32 %v369, %v370
        %v372 = vshll.u32 2102212464, %v360
        %v373 = vshrl.u32 920167782, %v361
        %v374 = vor.u32 %v372, %v373
        %v375 = vshll.u32 920167782, %v360
        %v376 = vshrl.u32 1326507024, %v361
        %v377 = vor.u32 %v375, %v376
        %vm378 = vcmp.lt.s32.totalorder %v359, 1
        %vm379 = vcmp.lt.s32.totalorder %v359, 2
        %vm380 = vcmp.lt.s32.totalorder %v359, 3
        %vm381 = vcmp.lt.s32.totalorder %v359, 4
        %v382 = vsel %vm378, %v362, %v365
        %v383 = vsel %vm381, %v371, 2102212464
        %v384 = vsel %vm380, %v368, %v383
        %v385 = vsel %vm379, %v382, %v384
        %v386 = vsel %vm378, %v365, %v368
        %v387 = vsel %vm381, %v374, 920167782
        %v388 = vsel %vm380, %v371, %v387
        %v389 = vsel %vm379, %v386, %v388
        %v390 = vsel %vm378, %v368, %v371
        %v391 = vsel %vm381, %v377, 1326507024
        %v392 = vsel %vm380, %v374, %v391
        %v393 = vsel %vm379, %v390, %v392
        %v394 = vshll.u32 %v354, 8
        %v395 = vmul.u32.u64.compose %v394, %v393
        %v396 = vextract.low.u32 %v395
        %v397 = vextract.high.u32 %v395
        %v398 = vmul.u32.u64.compose %v394, %v389
        %v399 = vextract.low.u32 %v398
        %v400 = vextract.high.u32 %v398
        %v401 = vmul.u32 %v394, %v385
        %v402 = vadd.s32 %v397, %v399
        %vm403 = vc.u32 %v397, %v399
        %v404 = vadd.s32 %v400, 1
        %v405 = vsel %vm403, %v404, %v400
        %v406 = vadd.s32 %v401, %v405
        %v407 = vadd.s32 %v406, 536870912
        %v408 = vshrl.u32 %v407, 30
        %v409 = vshll.u32 %v408, 30
        %v410 = vsub.s32 %v406, %v409
        %vm411 = vcmp.lt.s32.totalorder %v410, 0
        %v412 = vsub.s32 0, %v410
        %v413 = vsel %vm411, %v412, %v410
        %v414 = vclz %v413
        %v415 = vsub.s32 %v414, 2
        %vm416 = vcmp.gt.s32.totalorder 0, %v415
        %v417 = vsel %vm416, 0, %v415
        %v418 = vsub.s32 32, %v417
        %v419 = vshll.u32 %v410, %v417
        %v420 = vshrl.u32 %v402, %v418
        %v421 = vor.u32 %v419, %v420
        %v422 = vsub.s32 4294967266, %v417
        %v423 = vadd.s32 %v422, 127
        %v424 = vshll.u32 %v423, 23
        %v425 = vor.u32 4788187, %v424
        %v426 = vand.u32 2147483647, %v425
        %v428 = vcvt.s32.f32 %v421
        %v429 = vmul.f32 %v428, %v426
        %v430 = vxor.u32 %v429, 2147483648
        %v431 = vsel %vm348, %v430, %v429
        %v432 = vsub.s32 4, %v408
        %v433 = vsel %vm348, %v432, %v408
        %v434 = vsel %vm347, %v333, %v431
        %v435 = vsel %vm347, 0, %v433
        %v436 = vcosq.f32.pop %v434
        %v437 = vsinq.f32.pop %v434
        %vm438 = vweird.f32 %v333
        %v439 = vadd.s32 %v435, 3
        %v440 = vand.u32 %v439, 3
        %vm441 = vcmp.lt.s32.totalorder %v440, 2
        %vm442 = vcmp.eq.s32.totalorder %v440, 0
        %v443 = vxor.u32 %v437, 2147483648
        %v444 = vsel %vm442, %v436, %v443
        %vm445 = vcmp.eq.s32.totalorder %v440, 2
        %v446 = vxor.u32 %v436, 2147483648
        %v447 = vsel %vm445, %v446, %v437
        %v448 = vsel %vm441, %v444, %v447
        %v449 = vsel %vm438, nan, %v448
        %v450 = vand.u32 2147483647, %v338
        %vm451 = vcmp.le.f32.partialorder %v450, 0.7853982
        %vm452 = vcmp.lt.s32.totalorder %v338, 0
        %v453 = vand.u32 %v338, 2139095040
        %v454 = vshrl.u32 %v453, 23
        %v455 = vsub.s32 %v454, 127
        %v456 = vand.u32 2147483647, %v338
        %v457 = vand.u32 %v456, 8388607
        %v458 = vor.u32 %v457, 8388608
        %v459 = vsub.s32 0, %v458
        %v460 = vadd.s32 %v455, 1
        %vm461 = vcmp.gt.s32.totalorder %v460, 0
        %v462 = vsel %vm461, %v460, 0
        %v463 = vshrl.u32 %v462, 5
        %v464 = vand.u32 %v462, 31
        %v465 = vsub.s32 32, %v464
        %v466 = vshrl.u32 683565275, %v465
        %v467 = vshll.u32 683565275, %v464
        %v468 = vshrl.u32 2475754826, %v465
        %v469 = vor.u32 %v467, %v468
        %v470 = vshll.u32 2475754826, %v464
        %v471 = vshrl.u32 2131351028, %v465
        %v472 = vor.u32 %v470, %v471
        %v473 = vshll.u32 2131351028, %v464
        %v474 = vshrl.u32 2102212464, %v465
        %v475 = vor.u32 %v473, %v474
        %v476 = vshll.u32 2102212464, %v464
        %v477 = vshrl.u32 920167782, %v465
        %v478 = vor.u32 %v476, %v477
        %v479 = vshll.u32 920167782, %v464
        %v480 = vshrl.u32 1326507024, %v465
        %v481 = vor.u32 %v479, %v480
        %vm482 = vcmp.lt.s32.totalorder %v463, 1
        %vm483 = vcmp.lt.s32.totalorder %v463, 2
        %vm484 = vcmp.lt.s32.totalorder %v463, 3
        %vm485 = vcmp.lt.s32.totalorder %v463, 4
        %v486 = vsel %vm482, %v466, %v469
        %v487 = vsel %vm485, %v475, 2102212464
        %v488 = vsel %vm484, %v472, %v487
        %v489 = vsel %vm483, %v486, %v488
        %v490 = vsel %vm482, %v469, %v472
        %v491 = vsel %vm485, %v478, 920167782
        %v492 = vsel %vm484, %v475, %v491
        %v493 = vsel %vm483, %v490, %v492
        %v494 = vsel %vm482, %v472, %v475
        %v495 = vsel %vm485, %v481, 1326507024
        %v496 = vsel %vm484, %v478, %v495
        %v497 = vsel %vm483, %v494, %v496
        %v498 = vshll.u32 %v458, 8
        %v499 = vmul.u32.u64.compose %v498, %v497
        %v500 = vextract.low.u32 %v499
        %v501 = vextract.high.u32 %v499
        %v502 = vmul.u32.u64.compose %v498, %v493
        %v503 = vextract.low.u32 %v502
        %v504 = vextract.high.u32 %v502
        %v505 = vmul.u32 %v498, %v489
        %v506 = vadd.s32 %v501, %v503
        %vm507 = vc.u32 %v501, %v503
        %v508 = vadd.s32 %v504, 1
        %v509 = vsel %vm507, %v508, %v504
        %v510 = vadd.s32 %v505, %v509
        %v511 = vadd.s32 %v510, 536870912
        %v512 = vshrl.u32 %v511, 30
        %v513 = vshll.u32 %v512, 30
        %v514 = vsub.s32 %v510, %v513
        %vm515 = vcmp.lt.s32.totalorder %v514, 0
        %v516 = vsub.s32 0, %v514
        %v517 = vsel %vm515, %v516, %v514
        %v518 = vclz %v517
        %v519 = vsub.s32 %v518, 2
        %vm520 = vcmp.gt.s32.totalorder 0, %v519
        %v521 = vsel %vm520, 0, %v519
        %v522 = vsub.s32 32, %v521
        %v523 = vshll.u32 %v514, %v521
        %v524 = vshrl.u32 %v506, %v522
        %v525 = vor.u32 %v523, %v524
        %v526 = vsub.s32 4294967266, %v521
        %v527 = vadd.s32 %v526, 127
        %v528 = vshll.u32 %v527, 23
        %v529 = vor.u32 4788187, %v528
        %v530 = vand.u32 2147483647, %v529
        %v532 = vcvt.s32.f32 %v525
        %v533 = vmul.f32 %v532, %v530
        %v534 = vxor.u32 %v533, 2147483648
        %v535 = vsel %vm452, %v534, %v533
        %v536 = vsub.s32 4, %v512
        %v537 = vsel %vm452, %v536, %v512
        %v538 = vsel %vm451, %v338, %v535
        %v539 = vsel %vm451, 0, %v537
        %v540 = vcosq.f32.pop %v538
        %v541 = vsinq.f32.pop %v538
        %vm542 = vweird.f32 %v338
        %v543 = vadd.s32 %v539, 3
        %v544 = vand.u32 %v543, 3
        %vm545 = vcmp.lt.s32.totalorder %v544, 2
        %vm546 = vcmp.eq.s32.totalorder %v544, 0
        %v547 = vxor.u32 %v541, 2147483648
        %v548 = vsel %vm546, %v540, %v547
        %vm549 = vcmp.eq.s32.totalorder %v544, 2
        %v550 = vxor.u32 %v540, 2147483648
        %v551 = vsel %vm549, %v550, %v541
        %v552 = vsel %vm545, %v548, %v551
        %v553 = vsel %vm542, nan, %v552
        %v554 = vand.u32 2147483647, %v343
        %vm555 = vcmp.le.f32.partialorder %v554, 0.7853982
        %vm556 = vcmp.lt.s32.totalorder %v343, 0
        %v557 = vand.u32 %v343, 2139095040
        %v558 = vshrl.u32 %v557, 23
        %v559 = vsub.s32 %v558, 127
        %v560 = vand.u32 2147483647, %v343
        %v561 = vand.u32 %v560, 8388607
        %v562 = vor.u32 %v561, 8388608
        %v563 = vsub.s32 0, %v562
        %v564 = vadd.s32 %v559, 1
        %vm565 = vcmp.gt.s32.totalorder %v564, 0
        %v566 = vsel %vm565, %v564, 0
        %v567 = vshrl.u32 %v566, 5
        %v568 = vand.u32 %v566, 31
        %v569 = vsub.s32 32, %v568
        %v570 = vshrl.u32 683565275, %v569
        %v571 = vshll.u32 683565275, %v568
        %v572 = vshrl.u32 2475754826, %v569
        %v573 = vor.u32 %v571, %v572
        %v574 = vshll.u32 2475754826, %v568
        %v575 = vshrl.u32 2131351028, %v569
        %v576 = vor.u32 %v574, %v575
        %v577 = vshll.u32 2131351028, %v568
        %v578 = vshrl.u32 2102212464, %v569
        %v579 = vor.u32 %v577, %v578
        %v580 = vshll.u32 2102212464, %v568
        %v581 = vshrl.u32 920167782, %v569
        %v582 = vor.u32 %v580, %v581
        %v583 = vshll.u32 920167782, %v568
        %v584 = vshrl.u32 1326507024, %v569
        %v585 = vor.u32 %v583, %v584
        %vm586 = vcmp.lt.s32.totalorder %v567, 1
        %vm587 = vcmp.lt.s32.totalorder %v567, 2
        %vm588 = vcmp.lt.s32.totalorder %v567, 3
        %vm589 = vcmp.lt.s32.totalorder %v567, 4
        %v590 = vsel %vm586, %v570, %v573
        %v591 = vsel %vm589, %v579, 2102212464
        %v592 = vsel %vm588, %v576, %v591
        %v593 = vsel %vm587, %v590, %v592
        %v594 = vsel %vm586, %v573, %v576
        %v595 = vsel %vm589, %v582, 920167782
        %v596 = vsel %vm588, %v579, %v595
        %v597 = vsel %vm587, %v594, %v596
        %v598 = vsel %vm586, %v576, %v579
        %v599 = vsel %vm589, %v585, 1326507024
        %v600 = vsel %vm588, %v582, %v599
        %v601 = vsel %vm587, %v598, %v600
        %v602 = vshll.u32 %v562, 8
        %v603 = vmul.u32.u64.compose %v602, %v601
        %v604 = vextract.low.u32 %v603
        %v605 = vextract.high.u32 %v603
        %v606 = vmul.u32.u64.compose %v602, %v597
        %v607 = vextract.low.u32 %v606
        %v608 = vextract.high.u32 %v606
        %v609 = vmul.u32 %v602, %v593
        %v610 = vadd.s32 %v605, %v607
        %vm611 = vc.u32 %v605, %v607
        %v612 = vadd.s32 %v608, 1
        %v613 = vsel %vm611, %v612, %v608
        %v614 = vadd.s32 %v609, %v613
        %v615 = vadd.s32 %v614, 536870912
        %v616 = vshrl.u32 %v615, 30
        %v617 = vshll.u32 %v616, 30
        %v618 = vsub.s32 %v614, %v617
        %vm619 = vcmp.lt.s32.totalorder %v618, 0
        %v620 = vsub.s32 0, %v618
        %v621 = vsel %vm619, %v620, %v618
        %v622 = vclz %v621
        %v623 = vsub.s32 %v622, 2
        %vm624 = vcmp.gt.s32.totalorder 0, %v623
        %v625 = vsel %vm624, 0, %v623
        %v626 = vsub.s32 32, %v625
        %v627 = vshll.u32 %v618, %v625
        %v628 = vshrl.u32 %v610, %v626
        %v629 = vor.u32 %v627, %v628
        %v630 = vsub.s32 4294967266, %v625
        %v631 = vadd.s32 %v630, 127
        %v632 = vshll.u32 %v631, 23
        %v633 = vor.u32 4788187, %v632
        %v634 = vand.u32 2147483647, %v633
        %v636 = vcvt.s32.f32 %v629
        %v637 = vmul.f32 %v636, %v634
        %v638 = vxor.u32 %v637, 2147483648
        %v639 = vsel %vm556, %v638, %v637
        %v640 = vsub.s32 4, %v616
        %v641 = vsel %vm556, %v640, %v616
        %v642 = vsel %vm555, %v343, %v639
        %v643 = vsel %vm555, 0, %v641
        %v644 = vcosq.f32.pop %v642
        %v645 = vsinq.f32.pop %v642
        %vm646 = vweird.f32 %v343
        %v647 = vadd.s32 %v643, 3
        %v648 = vand.u32 %v647, 3
        %vm649 = vcmp.lt.s32.totalorder %v648, 2
        %vm650 = vcmp.eq.s32.totalorder %v648, 0
        %v651 = vxor.u32 %v645, 2147483648
        %v652 = vsel %vm650, %v644, %v651
        %vm653 = vcmp.eq.s32.totalorder %v648, 2
        %v654 = vxor.u32 %v644, 2147483648
        %v655 = vsel %vm653, %v654, %v645
        %v656 = vsel %vm649, %v652, %v655
        %v657 = vsel %vm646, nan, %v656
        %v658 = vld [vmem:[#allocation2] sm:$0xff]
        %v659 = vld [vmem:[#allocation2 + $0x8] sm:$0xff]
        %v660 = vld [vmem:[#allocation2 + $0x10] sm:$0xff]
        %v661 = vld [vmem:[#allocation2 + $0x18] sm:$0xff]
        %v662 = vld [vmem:[#allocation2 + $0x20] sm:$0xff]
        %v663 = vld [vmem:[#allocation2 + $0x28] sm:$0xff]
        %v664 = vld [vmem:[#allocation2 + $0x30] sm:$0xff]
        %v665 = vld [vmem:[#allocation2 + $0x38] sm:$0xff]
        %v666 = vld [vmem:[#allocation2 + $0x40] sm:$0xff]
        %v667 = vld [vmem:[#allocation2 + $0x48] sm:$0xff]
        %v668 = vld [vmem:[#allocation2 + $0x50] sm:$0xff]
        %v669 = vld [vmem:[#allocation2 + $0x58] sm:$0xff]
        %v670 = vld [vmem:[#allocation2 + $0x60] sm:$0xff]
        %v671 = vld [vmem:[#allocation2 + $0x68] sm:$0xff]
        %v672 = vld [vmem:[#allocation2 + $0x70] sm:$0xff]
        %v673 = vld [vmem:[#allocation2 + $0x78] sm:$0xff]
        %v674 = vld [vmem:[%s4] sm:$0x1]
        %v676 = vlaneseq
        %v677 = vshrl.u32 %v676, 7
        %v678 = vsub.s32 0, %v677
        %v679 = vrot.slane %v674, %v678
        %681 = vmatprep.subr.mxu0 0.0
        %682 = vmatpush1.msra.mxu0 %v658
        %683 = vmatprep.subr.mxu0 0.0
        %684 = vmatpush1.msra.mxu0 %v659
        %685 = vmatprep.subr.mxu0 0.0
        %686 = vmatpush1.msra.mxu0 %v660
        %687 = vmatprep.subr.mxu0 0.0
        %688 = vmatpush1.msra.mxu0 %v661
        %689 = vmatprep.subr.mxu0 0.0
        %690 = vmatpush1.msra.mxu0 %v662
        %691 = vmatprep.subr.mxu0 0.0
        %692 = vmatpush1.msra.mxu0 %v663
        %693 = vmatprep.subr.mxu0 0.0
        %694 = vmatpush1.msra.mxu0 %v664
        %695 = vmatprep.subr.mxu0 0.0
        %696 = vmatpush1.msra.mxu0 %v665
        %697 = vmatprep.subr.mxu0 0.0
        %698 = vmatpush1.msra.mxu0 %v666
        %699 = vmatprep.subr.mxu0 0.0
        %700 = vmatpush1.msra.mxu0 %v667
        %701 = vmatprep.subr.mxu0 0.0
        %702 = vmatpush1.msra.mxu0 %v668
        %703 = vmatprep.subr.mxu0 0.0
        %704 = vmatpush1.msra.mxu0 %v669
        %705 = vmatprep.subr.mxu0 0.0
        %706 = vmatpush1.msra.mxu0 %v670
        %707 = vmatprep.subr.mxu0 0.0
        %708 = vmatpush1.msra.mxu0 %v671
        %709 = vmatprep.subr.mxu0 0.0
        %710 = vmatpush1.msra.mxu0 %v672
        %711 = vmatprep.subr.mxu0 0.0
        %712 = vmatpush1.msra.mxu0 %v673
        %713 = vmatprep.subr.mxu0 0.0
        %714 = vmatpush1.msra.mxu0 0.0
        %715 = vmatprep.subr.mxu0 0.0
        %716 = vmatpush1.msra.mxu0 0.0
        %717 = vmatprep.subr.mxu0 0.0
        %718 = vmatpush1.msra.mxu0 0.0
        %719 = vmatprep.subr.mxu0 0.0
        %720 = vmatpush1.msra.mxu0 0.0
        %721 = vmatprep.subr.mxu0 0.0
        %722 = vmatpush1.msra.mxu0 0.0
        %723 = vmatprep.subr.mxu0 0.0
        %724 = vmatpush1.msra.mxu0 0.0
        %725 = vmatprep.subr.mxu0 0.0
        %726 = vmatpush1.msra.mxu0 0.0
        %727 = vmatprep.subr.mxu0 0.0
        %728 = vmatpush1.msra.mxu0 0.0
        %729 = vmatprep.subr.mxu0 0.0
        %730 = vmatpush1.msra.mxu0 0.0
        %731 = vmatprep.subr.mxu0 0.0
        %732 = vmatpush1.msra.mxu0 0.0
        %733 = vmatprep.subr.mxu0 0.0
        %734 = vmatpush1.msra.mxu0 0.0
        %735 = vmatprep.subr.mxu0 0.0
        %736 = vmatpush1.msra.mxu0 0.0
        %737 = vmatprep.subr.mxu0 0.0
        %738 = vmatpush1.msra.mxu0 0.0
        %739 = vmatprep.subr.mxu0 0.0
        %740 = vmatpush1.msra.mxu0 0.0
        %741 = vmatprep.subr.mxu0 0.0
        %742 = vmatpush1.msra.mxu0 0.0
        %743 = vmatprep.subr.mxu0 0.0
        %744 = vmatpush1.msra.mxu0 0.0
        %745 = vmatprep.mubr.f32.mxu0 0.0
        %746 = vmatmul.mubr.f32.gmra.mrb[0].mxu0 %v449
        %v747 = vpop.f32.mrb[0].mxu0
        %v748 = vadd.f32 %v679, %v747
        %v749 = vpop.f32.mrb[0].mxu0
        %750 = vmatprep.mubr.f32.mxu0 0.0
        %751 = vmatmul.mubr.f32.gmra.mrb[0].mxu0 %v553
        %v752 = vpop.f32.mrb[0].mxu0
        %v753 = vadd.f32 %v679, %v752
        %v754 = vpop.f32.mrb[0].mxu0
        %755 = vmatprep.mubr.f32.mxu0 0.0
        %756 = vmatmul.mubr.f32.gmra.mrb[0].mxu0 %v657
        %v757 = vpop.f32.mrb[0].mxu0
        %v758 = vadd.f32 %v679, %v757
        %v759 = vpop.f32.mrb[0].mxu0
        %760 = vdwg.mxu0
        %v761 = vand.u32 2147483647, %v748
        %vm762 = vcmp.le.f32.partialorder %v761, 0.7853982
        %vm763 = vcmp.lt.s32.totalorder %v748, 0
        %v764 = vand.u32 %v748, 2139095040
        %v765 = vshrl.u32 %v764, 23
        %v766 = vsub.s32 %v765, 127
        %v767 = vand.u32 2147483647, %v748
        %v768 = vand.u32 %v767, 8388607
        %v769 = vor.u32 %v768, 8388608
        %v770 = vsub.s32 0, %v769
        %v771 = vadd.s32 %v766, 1
        %vm772 = vcmp.gt.s32.totalorder %v771, 0
        %v773 = vsel %vm772, %v771, 0
        %v774 = vshrl.u32 %v773, 5
        %v775 = vand.u32 %v773, 31
        %v776 = vsub.s32 32, %v775
        %v777 = vshrl.u32 683565275, %v776
        %v778 = vshll.u32 683565275, %v775
        %v779 = vshrl.u32 2475754826, %v776
        %v780 = vor.u32 %v778, %v779
        %v781 = vshll.u32 2475754826, %v775
        %v782 = vshrl.u32 2131351028, %v776
        %v783 = vor.u32 %v781, %v782
        %v784 = vshll.u32 2131351028, %v775
        %v785 = vshrl.u32 2102212464, %v776
        %v786 = vor.u32 %v784, %v785
        %v787 = vshll.u32 2102212464, %v775
        %v788 = vshrl.u32 920167782, %v776
        %v789 = vor.u32 %v787, %v788
        %v790 = vshll.u32 920167782, %v775
        %v791 = vshrl.u32 1326507024, %v776
        %v792 = vor.u32 %v790, %v791
        %vm793 = vcmp.lt.s32.totalorder %v774, 1
        %vm794 = vcmp.lt.s32.totalorder %v774, 2
        %vm795 = vcmp.lt.s32.totalorder %v774, 3
        %vm796 = vcmp.lt.s32.totalorder %v774, 4
        %v797 = vsel %vm793, %v777, %v780
        %v798 = vsel %vm796, %v786, 2102212464
        %v799 = vsel %vm795, %v783, %v798
        %v800 = vsel %vm794, %v797, %v799
        %v801 = vsel %vm793, %v780, %v783
        %v802 = vsel %vm796, %v789, 920167782
        %v803 = vsel %vm795, %v786, %v802
        %v804 = vsel %vm794, %v801, %v803
        %v805 = vsel %vm793, %v783, %v786
        %v806 = vsel %vm796, %v792, 1326507024
        %v807 = vsel %vm795, %v789, %v806
        %v808 = vsel %vm794, %v805, %v807
        %v809 = vshll.u32 %v769, 8
        %v810 = vmul.u32.u64.compose %v809, %v808
        %v811 = vextract.low.u32 %v810
        %v812 = vextract.high.u32 %v810
        %v813 = vmul.u32.u64.compose %v809, %v804
        %v814 = vextract.low.u32 %v813
        %v815 = vextract.high.u32 %v813
        %v816 = vmul.u32 %v809, %v800
        %v817 = vadd.s32 %v812, %v814
        %vm818 = vc.u32 %v812, %v814
        %v819 = vadd.s32 %v815, 1
        %v820 = vsel %vm818, %v819, %v815
        %v821 = vadd.s32 %v816, %v820
        %v822 = vadd.s32 %v821, 536870912
        %v823 = vshrl.u32 %v822, 30
        %v824 = vshll.u32 %v823, 30
        %v825 = vsub.s32 %v821, %v824
        %vm826 = vcmp.lt.s32.totalorder %v825, 0
        %v827 = vsub.s32 0, %v825
        %v828 = vsel %vm826, %v827, %v825
        %v829 = vclz %v828
        %v830 = vsub.s32 %v829, 2
        %vm831 = vcmp.gt.s32.totalorder 0, %v830
        %v832 = vsel %vm831, 0, %v830
        %v833 = vsub.s32 32, %v832
        %v834 = vshll.u32 %v825, %v832
        %v835 = vshrl.u32 %v817, %v833
        %v836 = vor.u32 %v834, %v835
        %v837 = vsub.s32 4294967266, %v832
        %v838 = vadd.s32 %v837, 127
        %v839 = vshll.u32 %v838, 23
        %v840 = vor.u32 4788187, %v839
        %v841 = vand.u32 2147483647, %v840
        %v843 = vcvt.s32.f32 %v836
        %v844 = vmul.f32 %v843, %v841
        %v845 = vxor.u32 %v844, 2147483648
        %v846 = vsel %vm763, %v845, %v844
        %v847 = vsub.s32 4, %v823
        %v848 = vsel %vm763, %v847, %v823
        %v849 = vsel %vm762, %v748, %v846
        %v850 = vsel %vm762, 0, %v848
        %v851 = vcosq.f32.pop %v849
        %v852 = vsinq.f32.pop %v849
        %vm853 = vweird.f32 %v748
        %v854 = vadd.s32 %v850, 3
        %v855 = vand.u32 %v854, 3
        %vm856 = vcmp.lt.s32.totalorder %v855, 2
        %vm857 = vcmp.eq.s32.totalorder %v855, 0
        %v858 = vxor.u32 %v852, 2147483648
        %v859 = vsel %vm857, %v851, %v858
        %vm860 = vcmp.eq.s32.totalorder %v855, 2
        %v861 = vxor.u32 %v851, 2147483648
        %v862 = vsel %vm860, %v861, %v852
        %v863 = vsel %vm856, %v859, %v862
        %v864 = vsel %vm853, nan, %v863
        %v865 = vand.u32 2147483647, %v753
        %vm866 = vcmp.le.f32.partialorder %v865, 0.7853982
        %vm867 = vcmp.lt.s32.totalorder %v753, 0
        %v868 = vand.u32 %v753, 2139095040
        %v869 = vshrl.u32 %v868, 23
        %v870 = vsub.s32 %v869, 127
        %v871 = vand.u32 2147483647, %v753
        %v872 = vand.u32 %v871, 8388607
        %v873 = vor.u32 %v872, 8388608
        %v874 = vsub.s32 0, %v873
        %v875 = vadd.s32 %v870, 1
        %vm876 = vcmp.gt.s32.totalorder %v875, 0
        %v877 = vsel %vm876, %v875, 0
        %v878 = vshrl.u32 %v877, 5
        %v879 = vand.u32 %v877, 31
        %v880 = vsub.s32 32, %v879
        %v881 = vshrl.u32 683565275, %v880
        %v882 = vshll.u32 683565275, %v879
        %v883 = vshrl.u32 2475754826, %v880
        %v884 = vor.u32 %v882, %v883
        %v885 = vshll.u32 2475754826, %v879
        %v886 = vshrl.u32 2131351028, %v880
        %v887 = vor.u32 %v885, %v886
        %v888 = vshll.u32 2131351028, %v879
        %v889 = vshrl.u32 2102212464, %v880
        %v890 = vor.u32 %v888, %v889
        %v891 = vshll.u32 2102212464, %v879
        %v892 = vshrl.u32 920167782, %v880
        %v893 = vor.u32 %v891, %v892
        %v894 = vshll.u32 920167782, %v879
        %v895 = vshrl.u32 1326507024, %v880
        %v896 = vor.u32 %v894, %v895
        %vm897 = vcmp.lt.s32.totalorder %v878, 1
        %vm898 = vcmp.lt.s32.totalorder %v878, 2
        %vm899 = vcmp.lt.s32.totalorder %v878, 3
        %vm900 = vcmp.lt.s32.totalorder %v878, 4
        %v901 = vsel %vm897, %v881, %v884
        %v902 = vsel %vm900, %v890, 2102212464
        %v903 = vsel %vm899, %v887, %v902
        %v904 = vsel %vm898, %v901, %v903
        %v905 = vsel %vm897, %v884, %v887
        %v906 = vsel %vm900, %v893, 920167782
        %v907 = vsel %vm899, %v890, %v906
        %v908 = vsel %vm898, %v905, %v907
        %v909 = vsel %vm897, %v887, %v890
        %v910 = vsel %vm900, %v896, 1326507024
        %v911 = vsel %vm899, %v893, %v910
        %v912 = vsel %vm898, %v909, %v911
        %v913 = vshll.u32 %v873, 8
        %v914 = vmul.u32.u64.compose %v913, %v912
        %v915 = vextract.low.u32 %v914
        %v916 = vextract.high.u32 %v914
        %v917 = vmul.u32.u64.compose %v913, %v908
        %v918 = vextract.low.u32 %v917
        %v919 = vextract.high.u32 %v917
        %v920 = vmul.u32 %v913, %v904
        %v921 = vadd.s32 %v916, %v918
        %vm922 = vc.u32 %v916, %v918
        %v923 = vadd.s32 %v919, 1
        %v924 = vsel %vm922, %v923, %v919
        %v925 = vadd.s32 %v920, %v924
        %v926 = vadd.s32 %v925, 536870912
        %v927 = vshrl.u32 %v926, 30
        %v928 = vshll.u32 %v927, 30
        %v929 = vsub.s32 %v925, %v928
        %vm930 = vcmp.lt.s32.totalorder %v929, 0
        %v931 = vsub.s32 0, %v929
        %v932 = vsel %vm930, %v931, %v929
        %v933 = vclz %v932
        %v934 = vsub.s32 %v933, 2
        %vm935 = vcmp.gt.s32.totalorder 0, %v934
        %v936 = vsel %vm935, 0, %v934
        %v937 = vsub.s32 32, %v936
        %v938 = vshll.u32 %v929, %v936
        %v939 = vshrl.u32 %v921, %v937
        %v940 = vor.u32 %v938, %v939
        %v941 = vsub.s32 4294967266, %v936
        %v942 = vadd.s32 %v941, 127
        %v943 = vshll.u32 %v942, 23
        %v944 = vor.u32 4788187, %v943
        %v945 = vand.u32 2147483647, %v944
        %v947 = vcvt.s32.f32 %v940
        %v948 = vmul.f32 %v947, %v945
        %v949 = vxor.u32 %v948, 2147483648
        %v950 = vsel %vm867, %v949, %v948
        %v951 = vsub.s32 4, %v927
        %v952 = vsel %vm867, %v951, %v927
        %v953 = vsel %vm866, %v753, %v950
        %v954 = vsel %vm866, 0, %v952
        %v955 = vcosq.f32.pop %v953
        %v956 = vsinq.f32.pop %v953
        %vm957 = vweird.f32 %v753
        %v958 = vadd.s32 %v954, 3
        %v959 = vand.u32 %v958, 3
        %vm960 = vcmp.lt.s32.totalorder %v959, 2
        %vm961 = vcmp.eq.s32.totalorder %v959, 0
        %v962 = vxor.u32 %v956, 2147483648
        %v963 = vsel %vm961, %v955, %v962
        %vm964 = vcmp.eq.s32.totalorder %v959, 2
        %v965 = vxor.u32 %v955, 2147483648
        %v966 = vsel %vm964, %v965, %v956
        %v967 = vsel %vm960, %v963, %v966
        %v968 = vsel %vm957, nan, %v967
        %v969 = vand.u32 2147483647, %v758
        %vm970 = vcmp.le.f32.partialorder %v969, 0.7853982
        %vm971 = vcmp.lt.s32.totalorder %v758, 0
        %v972 = vand.u32 %v758, 2139095040
        %v973 = vshrl.u32 %v972, 23
        %v974 = vsub.s32 %v973, 127
        %v975 = vand.u32 2147483647, %v758
        %v976 = vand.u32 %v975, 8388607
        %v977 = vor.u32 %v976, 8388608
        %v978 = vsub.s32 0, %v977
        %v979 = vadd.s32 %v974, 1
        %vm980 = vcmp.gt.s32.totalorder %v979, 0
        %v981 = vsel %vm980, %v979, 0
        %v982 = vshrl.u32 %v981, 5
        %v983 = vand.u32 %v981, 31
        %v984 = vsub.s32 32, %v983
        %v985 = vshrl.u32 683565275, %v984
        %v986 = vshll.u32 683565275, %v983
        %v987 = vshrl.u32 2475754826, %v984
        %v988 = vor.u32 %v986, %v987
        %v989 = vshll.u32 2475754826, %v983
        %v990 = vshrl.u32 2131351028, %v984
        %v991 = vor.u32 %v989, %v990
        %v992 = vshll.u32 2131351028, %v983
        %v993 = vshrl.u32 2102212464, %v984
        %v994 = vor.u32 %v992, %v993
        %v995 = vshll.u32 2102212464, %v983
        %v996 = vshrl.u32 920167782, %v984
        %v997 = vor.u32 %v995, %v996
        %v998 = vshll.u32 920167782, %v983
        %v999 = vshrl.u32 1326507024, %v984
        %v1000 = vor.u32 %v998, %v999
        %vm1001 = vcmp.lt.s32.totalorder %v982, 1
        %vm1002 = vcmp.lt.s32.totalorder %v982, 2
        %vm1003 = vcmp.lt.s32.totalorder %v982, 3
        %vm1004 = vcmp.lt.s32.totalorder %v982, 4
        %v1005 = vsel %vm1001, %v985, %v988
        %v1006 = vsel %vm1004, %v994, 2102212464
        %v1007 = vsel %vm1003, %v991, %v1006
        %v1008 = vsel %vm1002, %v1005, %v1007
        %v1009 = vsel %vm1001, %v988, %v991
        %v1010 = vsel %vm1004, %v997, 920167782
        %v1011 = vsel %vm1003, %v994, %v1010
        %v1012 = vsel %vm1002, %v1009, %v1011
        %v1013 = vsel %vm1001, %v991, %v994
        %v1014 = vsel %vm1004, %v1000, 1326507024
        %v1015 = vsel %vm1003, %v997, %v1014
        %v1016 = vsel %vm1002, %v1013, %v1015
        %v1017 = vshll.u32 %v977, 8
        %v1018 = vmul.u32.u64.compose %v1017, %v1016
        %v1019 = vextract.low.u32 %v1018
        %v1020 = vextract.high.u32 %v1018
        %v1021 = vmul.u32.u64.compose %v1017, %v1012
        %v1022 = vextract.low.u32 %v1021
        %v1023 = vextract.high.u32 %v1021
        %v1024 = vmul.u32 %v1017, %v1008
        %v1025 = vadd.s32 %v1020, %v1022
        %vm1026 = vc.u32 %v1020, %v1022
        %v1027 = vadd.s32 %v1023, 1
        %v1028 = vsel %vm1026, %v1027, %v1023
        %v1029 = vadd.s32 %v1024, %v1028
        %v1030 = vadd.s32 %v1029, 536870912
        %v1031 = vshrl.u32 %v1030, 30
        %v1032 = vshll.u32 %v1031, 30
        %v1033 = vsub.s32 %v1029, %v1032
        %vm1034 = vcmp.lt.s32.totalorder %v1033, 0
        %v1035 = vsub.s32 0, %v1033
        %v1036 = vsel %vm1034, %v1035, %v1033
        %v1037 = vclz %v1036
        %v1038 = vsub.s32 %v1037, 2
        %vm1039 = vcmp.gt.s32.totalorder 0, %v1038
        %v1040 = vsel %vm1039, 0, %v1038
        %v1041 = vsub.s32 32, %v1040
        %v1042 = vshll.u32 %v1033, %v1040
        %v1043 = vshrl.u32 %v1025, %v1041
        %v1044 = vor.u32 %v1042, %v1043
        %v1045 = vsub.s32 4294967266, %v1040
        %v1046 = vadd.s32 %v1045, 127
        %v1047 = vshll.u32 %v1046, 23
        %v1048 = vor.u32 4788187, %v1047
        %v1049 = vand.u32 2147483647, %v1048
        %v1051 = vcvt.s32.f32 %v1044
        %v1052 = vmul.f32 %v1051, %v1049
        %v1053 = vxor.u32 %v1052, 2147483648
        %v1054 = vsel %vm971, %v1053, %v1052
        %v1055 = vsub.s32 4, %v1031
        %v1056 = vsel %vm971, %v1055, %v1031
        %v1057 = vsel %vm970, %v758, %v1054
        %v1058 = vsel %vm970, 0, %v1056
        %v1059 = vcosq.f32.pop %v1057
        %v1060 = vsinq.f32.pop %v1057
        %vm1061 = vweird.f32 %v758
        %v1062 = vadd.s32 %v1058, 3
        %v1063 = vand.u32 %v1062, 3
        %vm1064 = vcmp.lt.s32.totalorder %v1063, 2
        %vm1065 = vcmp.eq.s32.totalorder %v1063, 0
        %v1066 = vxor.u32 %v1060, 2147483648
        %v1067 = vsel %vm1065, %v1059, %v1066
        %vm1068 = vcmp.eq.s32.totalorder %v1063, 2
        %v1069 = vxor.u32 %v1059, 2147483648
        %v1070 = vsel %vm1068, %v1069, %v1060
        %v1071 = vsel %vm1064, %v1067, %v1070
        %v1072 = vsel %vm1061, nan, %v1071
        %v1073 = vmul.f32 %v864, 0.33333334
        %v1074 = vmul.f32 %v968, 0.33333334
        %v1075 = vmul.f32 %v1072, 0.33333334
        %v1076 = vadd.f32 %v449, %v1073
        %v1077 = vadd.f32 %v553, %v1074
        %v1078 = vadd.f32 %v657, %v1075
        %s1079 = scalar_lea.vmem [#allocation2], 128
        %v1080 = vld [vmem:[%s1079] sm:$0xff]
        %v1081 = vld [vmem:[%s1079 + $0x8] sm:$0xff]
        %v1082 = vld [vmem:[%s1079 + $0x10] sm:$0xff]
        %v1083 = vld [vmem:[%s1079 + $0x18] sm:$0xff]
        %v1084 = vld [vmem:[%s1079 + $0x20] sm:$0xff]
        %v1085 = vld [vmem:[%s1079 + $0x28] sm:$0xff]
        %v1086 = vld [vmem:[%s1079 + $0x30] sm:$0xff]
        %v1087 = vld [vmem:[%s1079 + $0x38] sm:$0xff]
        %v1088 = vld [vmem:[%s1079 + $0x40] sm:$0xff]
        %v1089 = vld [vmem:[%s1079 + $0x48] sm:$0xff]
        %v1090 = vld [vmem:[%s1079 + $0x50] sm:$0xff]
        %v1091 = vld [vmem:[%s1079 + $0x58] sm:$0xff]
        %v1092 = vld [vmem:[%s1079 + $0x60] sm:$0xff]
        %v1093 = vld [vmem:[%s1079 + $0x68] sm:$0xff]
        %v1094 = vld [vmem:[%s1079 + $0x70] sm:$0xff]
        %v1095 = vld [vmem:[%s1079 + $0x78] sm:$0xff]
        %s1096 = scalar_lea.vmem %s4, 1
        %v1097 = vld [vmem:[%s1096] sm:$0x1]
        %v1099 = vlaneseq
        %v1100 = vshrl.u32 %v1099, 7
        %v1101 = vsub.s32 0, %v1100
        %v1102 = vrot.slane %v1097, %v1101
        %1104 = vmatprep.subr.mxu0 0.0
        %1105 = vmatpush1.msra.mxu0 %v1080
        %1106 = vmatprep.subr.mxu0 0.0
        %1107 = vmatpush1.msra.mxu0 %v1081
        %1108 = vmatprep.subr.mxu0 0.0
        %1109 = vmatpush1.msra.mxu0 %v1082
        %1110 = vmatprep.subr.mxu0 0.0
        %1111 = vmatpush1.msra.mxu0 %v1083
        %1112 = vmatprep.subr.mxu0 0.0
        %1113 = vmatpush1.msra.mxu0 %v1084
        %1114 = vmatprep.subr.mxu0 0.0
        %1115 = vmatpush1.msra.mxu0 %v1085
        %1116 = vmatprep.subr.mxu0 0.0
        %1117 = vmatpush1.msra.mxu0 %v1086
        %1118 = vmatprep.subr.mxu0 0.0
        %1119 = vmatpush1.msra.mxu0 %v1087
        %1120 = vmatprep.subr.mxu0 0.0
        %1121 = vmatpush1.msra.mxu0 %v1088
        %1122 = vmatprep.subr.mxu0 0.0
        %1123 = vmatpush1.msra.mxu0 %v1089
        %1124 = vmatprep.subr.mxu0 0.0
        %1125 = vmatpush1.msra.mxu0 %v1090
        %1126 = vmatprep.subr.mxu0 0.0
        %1127 = vmatpush1.msra.mxu0 %v1091
        %1128 = vmatprep.subr.mxu0 0.0
        %1129 = vmatpush1.msra.mxu0 %v1092
        %1130 = vmatprep.subr.mxu0 0.0
        %1131 = vmatpush1.msra.mxu0 %v1093
        %1132 = vmatprep.subr.mxu0 0.0
        %1133 = vmatpush1.msra.mxu0 %v1094
        %1134 = vmatprep.subr.mxu0 0.0
        %1135 = vmatpush1.msra.mxu0 %v1095
        %1136 = vmatprep.subr.mxu0 0.0
        %1137 = vmatpush1.msra.mxu0 0.0
        %1138 = vmatprep.subr.mxu0 0.0
        %1139 = vmatpush1.msra.mxu0 0.0
        %1140 = vmatprep.subr.mxu0 0.0
        %1141 = vmatpush1.msra.mxu0 0.0
        %1142 = vmatprep.subr.mxu0 0.0
        %1143 = vmatpush1.msra.mxu0 0.0
        %1144 = vmatprep.subr.mxu0 0.0
        %1145 = vmatpush1.msra.mxu0 0.0
        %1146 = vmatprep.subr.mxu0 0.0
        %1147 = vmatpush1.msra.mxu0 0.0
        %1148 = vmatprep.subr.mxu0 0.0
        %1149 = vmatpush1.msra.mxu0 0.0
        %1150 = vmatprep.subr.mxu0 0.0
        %1151 = vmatpush1.msra.mxu0 0.0
        %1152 = vmatprep.subr.mxu0 0.0
        %1153 = vmatpush1.msra.mxu0 0.0
        %1154 = vmatprep.subr.mxu0 0.0
        %1155 = vmatpush1.msra.mxu0 0.0
        %1156 = vmatprep.subr.mxu0 0.0
        %1157 = vmatpush1.msra.mxu0 0.0
        %1158 = vmatprep.subr.mxu0 0.0
        %1159 = vmatpush1.msra.mxu0 0.0
        %1160 = vmatprep.subr.mxu0 0.0
        %1161 = vmatpush1.msra.mxu0 0.0
        %1162 = vmatprep.subr.mxu0 0.0
        %1163 = vmatpush1.msra.mxu0 0.0
        %1164 = vmatprep.subr.mxu0 0.0
        %1165 = vmatpush1.msra.mxu0 0.0
        %1166 = vmatprep.subr.mxu0 0.0
        %1167 = vmatpush1.msra.mxu0 0.0
        %1168 = vmatprep.mubr.f32.mxu0 0.0
        %1169 = vmatmul.mubr.f32.gmra.mrb[0].mxu0 %v1076
        %v1170 = vpop.f32.mrb[0].mxu0
        %v1171 = vadd.f32 %v1102, %v1170
        %v1172 = vpop.f32.mrb[0].mxu0
        %1173 = vmatprep.mubr.f32.mxu0 0.0
        %1174 = vmatmul.mubr.f32.gmra.mrb[0].mxu0 %v1077
        %v1175 = vpop.f32.mrb[0].mxu0
        %v1176 = vadd.f32 %v1102, %v1175
        %v1177 = vpop.f32.mrb[0].mxu0
        %1178 = vmatprep.mubr.f32.mxu0 0.0
        %1179 = vmatmul.mubr.f32.gmra.mrb[0].mxu0 %v1078
        %v1180 = vpop.f32.mrb[0].mxu0
        %v1181 = vadd.f32 %v1102, %v1180
        %v1182 = vpop.f32.mrb[0].mxu0
        %1183 = vdwg.mxu0
        %v1184 = vand.u32 2147483647, %v1171
        %vm1185 = vcmp.le.f32.partialorder %v1184, 0.7853982
        %vm1186 = vcmp.lt.s32.totalorder %v1171, 0
        %v1187 = vand.u32 %v1171, 2139095040
        %v1188 = vshrl.u32 %v1187, 23
        %v1189 = vsub.s32 %v1188, 127
        %v1190 = vand.u32 2147483647, %v1171
        %v1191 = vand.u32 %v1190, 8388607
        %v1192 = vor.u32 %v1191, 8388608
        %v1193 = vsub.s32 0, %v1192
        %v1194 = vadd.s32 %v1189, 1
        %vm1195 = vcmp.gt.s32.totalorder %v1194, 0
        %v1196 = vsel %vm1195, %v1194, 0
        %v1197 = vshrl.u32 %v1196, 5
        %v1198 = vand.u32 %v1196, 31
        %v1199 = vsub.s32 32, %v1198
        %v1200 = vshrl.u32 683565275, %v1199
        %v1201 = vshll.u32 683565275, %v1198
        %v1202 = vshrl.u32 2475754826, %v1199
        %v1203 = vor.u32 %v1201, %v1202
        %v1204 = vshll.u32 2475754826, %v1198
        %v1205 = vshrl.u32 2131351028, %v1199
        %v1206 = vor.u32 %v1204, %v1205
        %v1207 = vshll.u32 2131351028, %v1198
        %v1208 = vshrl.u32 2102212464, %v1199
        %v1209 = vor.u32 %v1207, %v1208
        %v1210 = vshll.u32 2102212464, %v1198
        %v1211 = vshrl.u32 920167782, %v1199
        %v1212 = vor.u32 %v1210, %v1211
        %v1213 = vshll.u32 920167782, %v1198
        %v1214 = vshrl.u32 1326507024, %v1199
        %v1215 = vor.u32 %v1213, %v1214
        %vm1216 = vcmp.lt.s32.totalorder %v1197, 1
        %vm1217 = vcmp.lt.s32.totalorder %v1197, 2
        %vm1218 = vcmp.lt.s32.totalorder %v1197, 3
        %vm1219 = vcmp.lt.s32.totalorder %v1197, 4
        %v1220 = vsel %vm1216, %v1200, %v1203
        %v1221 = vsel %vm1219, %v1209, 2102212464
        %v1222 = vsel %vm1218, %v1206, %v1221
        %v1223 = vsel %vm1217, %v1220, %v1222
        %v1224 = vsel %vm1216, %v1203, %v1206
        %v1225 = vsel %vm1219, %v1212, 920167782
        %v1226 = vsel %vm1218, %v1209, %v1225
        %v1227 = vsel %vm1217, %v1224, %v1226
        %v1228 = vsel %vm1216, %v1206, %v1209
        %v1229 = vsel %vm1219, %v1215, 1326507024
        %v1230 = vsel %vm1218, %v1212, %v1229
        %v1231 = vsel %vm1217, %v1228, %v1230
        %v1232 = vshll.u32 %v1192, 8
        %v1233 = vmul.u32.u64.compose %v1232, %v1231
        %v1234 = vextract.low.u32 %v1233
        %v1235 = vextract.high.u32 %v1233
        %v1236 = vmul.u32.u64.compose %v1232, %v1227
        %v1237 = vextract.low.u32 %v1236
        %v1238 = vextract.high.u32 %v1236
        %v1239 = vmul.u32 %v1232, %v1223
        %v1240 = vadd.s32 %v1235, %v1237
        %vm1241 = vc.u32 %v1235, %v1237
        %v1242 = vadd.s32 %v1238, 1
        %v1243 = vsel %vm1241, %v1242, %v1238
        %v1244 = vadd.s32 %v1239, %v1243
        %v1245 = vadd.s32 %v1244, 536870912
        %v1246 = vshrl.u32 %v1245, 30
        %v1247 = vshll.u32 %v1246, 30
        %v1248 = vsub.s32 %v1244, %v1247
        %vm1249 = vcmp.lt.s32.totalorder %v1248, 0
        %v1250 = vsub.s32 0, %v1248
        %v1251 = vsel %vm1249, %v1250, %v1248
        %v1252 = vclz %v1251
        %v1253 = vsub.s32 %v1252, 2
        %vm1254 = vcmp.gt.s32.totalorder 0, %v1253
        %v1255 = vsel %vm1254, 0, %v1253
        %v1256 = vsub.s32 32, %v1255
        %v1257 = vshll.u32 %v1248, %v1255
        %v1258 = vshrl.u32 %v1240, %v1256
        %v1259 = vor.u32 %v1257, %v1258
        %v1260 = vsub.s32 4294967266, %v1255
        %v1261 = vadd.s32 %v1260, 127
        %v1262 = vshll.u32 %v1261, 23
        %v1263 = vor.u32 4788187, %v1262
        %v1264 = vand.u32 2147483647, %v1263
        %v1266 = vcvt.s32.f32 %v1259
        %v1267 = vmul.f32 %v1266, %v1264
        %v1268 = vxor.u32 %v1267, 2147483648
        %v1269 = vsel %vm1186, %v1268, %v1267
        %v1270 = vsub.s32 4, %v1246
        %v1271 = vsel %vm1186, %v1270, %v1246
        %v1272 = vsel %vm1185, %v1171, %v1269
        %v1273 = vsel %vm1185, 0, %v1271
        %v1274 = vcosq.f32.pop %v1272
        %v1275 = vsinq.f32.pop %v1272
        %vm1276 = vweird.f32 %v1171
        %v1277 = vadd.s32 %v1273, 3
        %v1278 = vand.u32 %v1277, 3
        %vm1279 = vcmp.lt.s32.totalorder %v1278, 2
        %vm1280 = vcmp.eq.s32.totalorder %v1278, 0
        %v1281 = vxor.u32 %v1275, 2147483648
        %v1282 = vsel %vm1280, %v1274, %v1281
        %vm1283 = vcmp.eq.s32.totalorder %v1278, 2
        %v1284 = vxor.u32 %v1274, 2147483648
        %v1285 = vsel %vm1283, %v1284, %v1275
        %v1286 = vsel %vm1279, %v1282, %v1285
        %v1287 = vsel %vm1276, nan, %v1286
        %v1288 = vand.u32 2147483647, %v1176
        %vm1289 = vcmp.le.f32.partialorder %v1288, 0.7853982
        %vm1290 = vcmp.lt.s32.totalorder %v1176, 0
        %v1291 = vand.u32 %v1176, 2139095040
        %v1292 = vshrl.u32 %v1291, 23
        %v1293 = vsub.s32 %v1292, 127
        %v1294 = vand.u32 2147483647, %v1176
        %v1295 = vand.u32 %v1294, 8388607
        %v1296 = vor.u32 %v1295, 8388608
        %v1297 = vsub.s32 0, %v1296
        %v1298 = vadd.s32 %v1293, 1
        %vm1299 = vcmp.gt.s32.totalorder %v1298, 0
        %v1300 = vsel %vm1299, %v1298, 0
        %v1301 = vshrl.u32 %v1300, 5
        %v1302 = vand.u32 %v1300, 31
        %v1303 = vsub.s32 32, %v1302
        %v1304 = vshrl.u32 683565275, %v1303
        %v1305 = vshll.u32 683565275, %v1302
        %v1306 = vshrl.u32 2475754826, %v1303
        %v1307 = vor.u32 %v1305, %v1306
        %v1308 = vshll.u32 2475754826, %v1302
        %v1309 = vshrl.u32 2131351028, %v1303
        %v1310 = vor.u32 %v1308, %v1309
        %v1311 = vshll.u32 2131351028, %v1302
        %v1312 = vshrl.u32 2102212464, %v1303
        %v1313 = vor.u32 %v1311, %v1312
        %v1314 = vshll.u32 2102212464, %v1302
        %v1315 = vshrl.u32 920167782, %v1303
        %v1316 = vor.u32 %v1314, %v1315
        %v1317 = vshll.u32 920167782, %v1302
        %v1318 = vshrl.u32 1326507024, %v1303
        %v1319 = vor.u32 %v1317, %v1318
        %vm1320 = vcmp.lt.s32.totalorder %v1301, 1
        %vm1321 = vcmp.lt.s32.totalorder %v1301, 2
        %vm1322 = vcmp.lt.s32.totalorder %v1301, 3
        %vm1323 = vcmp.lt.s32.totalorder %v1301, 4
        %v1324 = vsel %vm1320, %v1304, %v1307
        %v1325 = vsel %vm1323, %v1313, 2102212464
        %v1326 = vsel %vm1322, %v1310, %v1325
        %v1327 = vsel %vm1321, %v1324, %v1326
        %v1328 = vsel %vm1320, %v1307, %v1310
        %v1329 = vsel %vm1323, %v1316, 920167782
        %v1330 = vsel %vm1322, %v1313, %v1329
        %v1331 = vsel %vm1321, %v1328, %v1330
        %v1332 = vsel %vm1320, %v1310, %v1313
        %v1333 = vsel %vm1323, %v1319, 1326507024
        %v1334 = vsel %vm1322, %v1316, %v1333
        %v1335 = vsel %vm1321, %v1332, %v1334
        %v1336 = vshll.u32 %v1296, 8
        %v1337 = vmul.u32.u64.compose %v1336, %v1335
        %v1338 = vextract.low.u32 %v1337
        %v1339 = vextract.high.u32 %v1337
        %v1340 = vmul.u32.u64.compose %v1336, %v1331
        %v1341 = vextract.low.u32 %v1340
        %v1342 = vextract.high.u32 %v1340
        %v1343 = vmul.u32 %v1336, %v1327
        %v1344 = vadd.s32 %v1339, %v1341
        %vm1345 = vc.u32 %v1339, %v1341
        %v1346 = vadd.s32 %v1342, 1
        %v1347 = vsel %vm1345, %v1346, %v1342
        %v1348 = vadd.s32 %v1343, %v1347
        %v1349 = vadd.s32 %v1348, 536870912
        %v1350 = vshrl.u32 %v1349, 30
        %v1351 = vshll.u32 %v1350, 30
        %v1352 = vsub.s32 %v1348, %v1351
        %vm1353 = vcmp.lt.s32.totalorder %v1352, 0
        %v1354 = vsub.s32 0, %v1352
        %v1355 = vsel %vm1353, %v1354, %v1352
        %v1356 = vclz %v1355
        %v1357 = vsub.s32 %v1356, 2
        %vm1358 = vcmp.gt.s32.totalorder 0, %v1357
        %v1359 = vsel %vm1358, 0, %v1357
        %v1360 = vsub.s32 32, %v1359
        %v1361 = vshll.u32 %v1352, %v1359
        %v1362 = vshrl.u32 %v1344, %v1360
        %v1363 = vor.u32 %v1361, %v1362
        %v1364 = vsub.s32 4294967266, %v1359
        %v1365 = vadd.s32 %v1364, 127
        %v1366 = vshll.u32 %v1365, 23
        %v1367 = vor.u32 4788187, %v1366
        %v1368 = vand.u32 2147483647, %v1367
        %v1370 = vcvt.s32.f32 %v1363
        %v1371 = vmul.f32 %v1370, %v1368
        %v1372 = vxor.u32 %v1371, 2147483648
        %v1373 = vsel %vm1290, %v1372, %v1371
        %v1374 = vsub.s32 4, %v1350
        %v1375 = vsel %vm1290, %v1374, %v1350
        %v1376 = vsel %vm1289, %v1176, %v1373
        %v1377 = vsel %vm1289, 0, %v1375
        %v1378 = vcosq.f32.pop %v1376
        %v1379 = vsinq.f32.pop %v1376
        %vm1380 = vweird.f32 %v1176
        %v1381 = vadd.s32 %v1377, 3
        %v1382 = vand.u32 %v1381, 3
        %vm1383 = vcmp.lt.s32.totalorder %v1382, 2
        %vm1384 = vcmp.eq.s32.totalorder %v1382, 0
        %v1385 = vxor.u32 %v1379, 2147483648
        %v1386 = vsel %vm1384, %v1378, %v1385
        %vm1387 = vcmp.eq.s32.totalorder %v1382, 2
        %v1388 = vxor.u32 %v1378, 2147483648
        %v1389 = vsel %vm1387, %v1388, %v1379
        %v1390 = vsel %vm1383, %v1386, %v1389
        %v1391 = vsel %vm1380, nan, %v1390
        %v1392 = vand.u32 2147483647, %v1181
        %vm1393 = vcmp.le.f32.partialorder %v1392, 0.7853982
        %vm1394 = vcmp.lt.s32.totalorder %v1181, 0
        %v1395 = vand.u32 %v1181, 2139095040
        %v1396 = vshrl.u32 %v1395, 23
        %v1397 = vsub.s32 %v1396, 127
        %v1398 = vand.u32 2147483647, %v1181
        %v1399 = vand.u32 %v1398, 8388607
        %v1400 = vor.u32 %v1399, 8388608
        %v1401 = vsub.s32 0, %v1400
        %v1402 = vadd.s32 %v1397, 1
        %vm1403 = vcmp.gt.s32.totalorder %v1402, 0
        %v1404 = vsel %vm1403, %v1402, 0
        %v1405 = vshrl.u32 %v1404, 5
        %v1406 = vand.u32 %v1404, 31
        %v1407 = vsub.s32 32, %v1406
        %v1408 = vshrl.u32 683565275, %v1407
        %v1409 = vshll.u32 683565275, %v1406
        %v1410 = vshrl.u32 2475754826, %v1407
        %v1411 = vor.u32 %v1409, %v1410
        %v1412 = vshll.u32 2475754826, %v1406
        %v1413 = vshrl.u32 2131351028, %v1407
        %v1414 = vor.u32 %v1412, %v1413
        %v1415 = vshll.u32 2131351028, %v1406
        %v1416 = vshrl.u32 2102212464, %v1407
        %v1417 = vor.u32 %v1415, %v1416
        %v1418 = vshll.u32 2102212464, %v1406
        %v1419 = vshrl.u32 920167782, %v1407
        %v1420 = vor.u32 %v1418, %v1419
        %v1421 = vshll.u32 920167782, %v1406
        %v1422 = vshrl.u32 1326507024, %v1407
        %v1423 = vor.u32 %v1421, %v1422
        %vm1424 = vcmp.lt.s32.totalorder %v1405, 1
        %vm1425 = vcmp.lt.s32.totalorder %v1405, 2
        %vm1426 = vcmp.lt.s32.totalorder %v1405, 3
        %vm1427 = vcmp.lt.s32.totalorder %v1405, 4
        %v1428 = vsel %vm1424, %v1408, %v1411
        %v1429 = vsel %vm1427, %v1417, 2102212464
        %v1430 = vsel %vm1426, %v1414, %v1429
        %v1431 = vsel %vm1425, %v1428, %v1430
        %v1432 = vsel %vm1424, %v1411, %v1414
        %v1433 = vsel %vm1427, %v1420, 920167782
        %v1434 = vsel %vm1426, %v1417, %v1433
        %v1435 = vsel %vm1425, %v1432, %v1434
        %v1436 = vsel %vm1424, %v1414, %v1417
        %v1437 = vsel %vm1427, %v1423, 1326507024
        %v1438 = vsel %vm1426, %v1420, %v1437
        %v1439 = vsel %vm1425, %v1436, %v1438
        %v1440 = vshll.u32 %v1400, 8
        %v1441 = vmul.u32.u64.compose %v1440, %v1439
        %v1442 = vextract.low.u32 %v1441
        %v1443 = vextract.high.u32 %v1441
        %v1444 = vmul.u32.u64.compose %v1440, %v1435
        %v1445 = vextract.low.u32 %v1444
        %v1446 = vextract.high.u32 %v1444
        %v1447 = vmul.u32 %v1440, %v1431
        %v1448 = vadd.s32 %v1443, %v1445
        %vm1449 = vc.u32 %v1443, %v1445
        %v1450 = vadd.s32 %v1446, 1
        %v1451 = vsel %vm1449, %v1450, %v1446
        %v1452 = vadd.s32 %v1447, %v1451
        %v1453 = vadd.s32 %v1452, 536870912
        %v1454 = vshrl.u32 %v1453, 30
        %v1455 = vshll.u32 %v1454, 30
        %v1456 = vsub.s32 %v1452, %v1455
        %vm1457 = vcmp.lt.s32.totalorder %v1456, 0
        %v1458 = vsub.s32 0, %v1456
        %v1459 = vsel %vm1457, %v1458, %v1456
        %v1460 = vclz %v1459
        %v1461 = vsub.s32 %v1460, 2
        %vm1462 = vcmp.gt.s32.totalorder 0, %v1461
        %v1463 = vsel %vm1462, 0, %v1461
        %v1464 = vsub.s32 32, %v1463
        %v1465 = vshll.u32 %v1456, %v1463
        %v1466 = vshrl.u32 %v1448, %v1464
        %v1467 = vor.u32 %v1465, %v1466
        %v1468 = vsub.s32 4294967266, %v1463
        %v1469 = vadd.s32 %v1468, 127
        %v1470 = vshll.u32 %v1469, 23
        %v1471 = vor.u32 4788187, %v1470
        %v1472 = vand.u32 2147483647, %v1471
        %v1474 = vcvt.s32.f32 %v1467
        %v1475 = vmul.f32 %v1474, %v1472
        %v1476 = vxor.u32 %v1475, 2147483648
        %v1477 = vsel %vm1394, %v1476, %v1475
        %v1478 = vsub.s32 4, %v1454
        %v1479 = vsel %vm1394, %v1478, %v1454
        %v1480 = vsel %vm1393, %v1181, %v1477
        %v1481 = vsel %vm1393, 0, %v1479
        %v1482 = vcosq.f32.pop %v1480
        %v1483 = vsinq.f32.pop %v1480
        %vm1484 = vweird.f32 %v1181
        %v1485 = vadd.s32 %v1481, 3
        %v1486 = vand.u32 %v1485, 3
        %vm1487 = vcmp.lt.s32.totalorder %v1486, 2
        %vm1488 = vcmp.eq.s32.totalorder %v1486, 0
        %v1489 = vxor.u32 %v1483, 2147483648
        %v1490 = vsel %vm1488, %v1482, %v1489
        %vm1491 = vcmp.eq.s32.totalorder %v1486, 2
        %v1492 = vxor.u32 %v1482, 2147483648
        %v1493 = vsel %vm1491, %v1492, %v1483
        %v1494 = vsel %vm1487, %v1490, %v1493
        %v1495 = vsel %vm1484, nan, %v1494
        %v1496 = vmul.f32 %v1287, 0.33333334
        %v1497 = vmul.f32 %v1391, 0.33333334
        %v1498 = vmul.f32 %v1495, 0.33333334
        %v1499 = vadd.f32 %v1076, %v1496
        %v1500 = vadd.f32 %v1077, %v1497
        %v1501 = vadd.f32 %v1078, %v1498
        %s1502 = scalar_lea.vmem [#allocation2], 256
        %v1503 = vld [vmem:[%s1502] sm:$0xff]
        %v1504 = vld [vmem:[%s1502 + $0x8] sm:$0xff]
        %v1505 = vld [vmem:[%s1502 + $0x10] sm:$0xff]
        %v1506 = vld [vmem:[%s1502 + $0x18] sm:$0xff]
        %v1507 = vld [vmem:[%s1502 + $0x20] sm:$0xff]
        %v1508 = vld [vmem:[%s1502 + $0x28] sm:$0xff]
        %v1509 = vld [vmem:[%s1502 + $0x30] sm:$0xff]
        %v1510 = vld [vmem:[%s1502 + $0x38] sm:$0xff]
        %v1511 = vld [vmem:[%s1502 + $0x40] sm:$0xff]
        %v1512 = vld [vmem:[%s1502 + $0x48] sm:$0xff]
        %v1513 = vld [vmem:[%s1502 + $0x50] sm:$0xff]
        %v1514 = vld [vmem:[%s1502 + $0x58] sm:$0xff]
        %v1515 = vld [vmem:[%s1502 + $0x60] sm:$0xff]
        %v1516 = vld [vmem:[%s1502 + $0x68] sm:$0xff]
        %v1517 = vld [vmem:[%s1502 + $0x70] sm:$0xff]
        %v1518 = vld [vmem:[%s1502 + $0x78] sm:$0xff]
        %s1519 = scalar_lea.vmem %s4, 2
        %v1520 = vld [vmem:[%s1519] sm:$0x1]
        %v1522 = vlaneseq
        %v1523 = vshrl.u32 %v1522, 7
        %v1524 = vsub.s32 0, %v1523
        %v1525 = vrot.slane %v1520, %v1524
        %1527 = vmatprep.subr.mxu0 0.0
        %1528 = vmatpush1.msra.mxu0 %v1503
        %1529 = vmatprep.subr.mxu0 0.0
        %1530 = vmatpush1.msra.mxu0 %v1504
        %1531 = vmatprep.subr.mxu0 0.0
        %1532 = vmatpush1.msra.mxu0 %v1505
        %1533 = vmatprep.subr.mxu0 0.0
        %1534 = vmatpush1.msra.mxu0 %v1506
        %1535 = vmatprep.subr.mxu0 0.0
        %1536 = vmatpush1.msra.mxu0 %v1507
        %1537 = vmatprep.subr.mxu0 0.0
        %1538 = vmatpush1.msra.mxu0 %v1508
        %1539 = vmatprep.subr.mxu0 0.0
        %1540 = vmatpush1.msra.mxu0 %v1509
        %1541 = vmatprep.subr.mxu0 0.0
        %1542 = vmatpush1.msra.mxu0 %v1510
        %1543 = vmatprep.subr.mxu0 0.0
        %1544 = vmatpush1.msra.mxu0 %v1511
        %1545 = vmatprep.subr.mxu0 0.0
        %1546 = vmatpush1.msra.mxu0 %v1512
        %1547 = vmatprep.subr.mxu0 0.0
        %1548 = vmatpush1.msra.mxu0 %v1513
        %1549 = vmatprep.subr.mxu0 0.0
        %1550 = vmatpush1.msra.mxu0 %v1514
        %1551 = vmatprep.subr.mxu0 0.0
        %1552 = vmatpush1.msra.mxu0 %v1515
        %1553 = vmatprep.subr.mxu0 0.0
        %1554 = vmatpush1.msra.mxu0 %v1516
        %1555 = vmatprep.subr.mxu0 0.0
        %1556 = vmatpush1.msra.mxu0 %v1517
        %1557 = vmatprep.subr.mxu0 0.0
        %1558 = vmatpush1.msra.mxu0 %v1518
        %1559 = vmatprep.subr.mxu0 0.0
        %1560 = vmatpush1.msra.mxu0 0.0
        %1561 = vmatprep.subr.mxu0 0.0
        %1562 = vmatpush1.msra.mxu0 0.0
        %1563 = vmatprep.subr.mxu0 0.0
        %1564 = vmatpush1.msra.mxu0 0.0
        %1565 = vmatprep.subr.mxu0 0.0
        %1566 = vmatpush1.msra.mxu0 0.0
        %1567 = vmatprep.subr.mxu0 0.0
        %1568 = vmatpush1.msra.mxu0 0.0
        %1569 = vmatprep.subr.mxu0 0.0
        %1570 = vmatpush1.msra.mxu0 0.0
        %1571 = vmatprep.subr.mxu0 0.0
        %1572 = vmatpush1.msra.mxu0 0.0
        %1573 = vmatprep.subr.mxu0 0.0
        %1574 = vmatpush1.msra.mxu0 0.0
        %1575 = vmatprep.subr.mxu0 0.0
        %1576 = vmatpush1.msra.mxu0 0.0
        %1577 = vmatprep.subr.mxu0 0.0
        %1578 = vmatpush1.msra.mxu0 0.0
        %1579 = vmatprep.subr.mxu0 0.0
        %1580 = vmatpush1.msra.mxu0 0.0
        %1581 = vmatprep.subr.mxu0 0.0
        %1582 = vmatpush1.msra.mxu0 0.0
        %1583 = vmatprep.subr.mxu0 0.0
        %1584 = vmatpush1.msra.mxu0 0.0
        %1585 = vmatprep.subr.mxu0 0.0
        %1586 = vmatpush1.msra.mxu0 0.0
        %1587 = vmatprep.subr.mxu0 0.0
        %1588 = vmatpush1.msra.mxu0 0.0
        %1589 = vmatprep.subr.mxu0 0.0
        %1590 = vmatpush1.msra.mxu0 0.0
        %1591 = vmatprep.mubr.f32.mxu0 0.0
        %1592 = vmatmul.mubr.f32.gmra.mrb[0].mxu0 %v1499
        %v1593 = vpop.f32.mrb[0].mxu0
        %v1594 = vadd.f32 %v1525, %v1593
        %v1595 = vpop.f32.mrb[0].mxu0
        %1596 = vmatprep.mubr.f32.mxu0 0.0
        %1597 = vmatmul.mubr.f32.gmra.mrb[0].mxu0 %v1500
        %v1598 = vpop.f32.mrb[0].mxu0
        %v1599 = vadd.f32 %v1525, %v1598
        %v1600 = vpop.f32.mrb[0].mxu0
        %1601 = vmatprep.mubr.f32.mxu0 0.0
        %1602 = vmatmul.mubr.f32.gmra.mrb[0].mxu0 %v1501
        %v1603 = vpop.f32.mrb[0].mxu0
        %v1604 = vadd.f32 %v1525, %v1603
        %v1605 = vpop.f32.mrb[0].mxu0
        %1606 = vdwg.mxu0
        %v1607 = vand.u32 2147483647, %v1594
        %vm1608 = vcmp.le.f32.partialorder %v1607, 0.7853982
        %vm1609 = vcmp.lt.s32.totalorder %v1594, 0
        %v1610 = vand.u32 %v1594, 2139095040
        %v1611 = vshrl.u32 %v1610, 23
        %v1612 = vsub.s32 %v1611, 127
        %v1613 = vand.u32 2147483647, %v1594
        %v1614 = vand.u32 %v1613, 8388607
        %v1615 = vor.u32 %v1614, 8388608
        %v1616 = vsub.s32 0, %v1615
        %v1617 = vadd.s32 %v1612, 1
        %vm1618 = vcmp.gt.s32.totalorder %v1617, 0
        %v1619 = vsel %vm1618, %v1617, 0
        %v1620 = vshrl.u32 %v1619, 5
        %v1621 = vand.u32 %v1619, 31
        %v1622 = vsub.s32 32, %v1621
        %v1623 = vshrl.u32 683565275, %v1622
        %v1624 = vshll.u32 683565275, %v1621
        %v1625 = vshrl.u32 2475754826, %v1622
        %v1626 = vor.u32 %v1624, %v1625
        %v1627 = vshll.u32 2475754826, %v1621
        %v1628 = vshrl.u32 2131351028, %v1622
        %v1629 = vor.u32 %v1627, %v1628
        %v1630 = vshll.u32 2131351028, %v1621
        %v1631 = vshrl.u32 2102212464, %v1622
        %v1632 = vor.u32 %v1630, %v1631
        %v1633 = vshll.u32 2102212464, %v1621
        %v1634 = vshrl.u32 920167782, %v1622
        %v1635 = vor.u32 %v1633, %v1634
        %v1636 = vshll.u32 920167782, %v1621
        %v1637 = vshrl.u32 1326507024, %v1622
        %v1638 = vor.u32 %v1636, %v1637
        %vm1639 = vcmp.lt.s32.totalorder %v1620, 1
        %vm1640 = vcmp.lt.s32.totalorder %v1620, 2
        %vm1641 = vcmp.lt.s32.totalorder %v1620, 3
        %vm1642 = vcmp.lt.s32.totalorder %v1620, 4
        %v1643 = vsel %vm1639, %v1623, %v1626
        %v1644 = vsel %vm1642, %v1632, 2102212464
        %v1645 = vsel %vm1641, %v1629, %v1644
        %v1646 = vsel %vm1640, %v1643, %v1645
        %v1647 = vsel %vm1639, %v1626, %v1629
        %v1648 = vsel %vm1642, %v1635, 920167782
        %v1649 = vsel %vm1641, %v1632, %v1648
        %v1650 = vsel %vm1640, %v1647, %v1649
        %v1651 = vsel %vm1639, %v1629, %v1632
        %v1652 = vsel %vm1642, %v1638, 1326507024
        %v1653 = vsel %vm1641, %v1635, %v1652
        %v1654 = vsel %vm1640, %v1651, %v1653
        %v1655 = vshll.u32 %v1615, 8
        %v1656 = vmul.u32.u64.compose %v1655, %v1654
        %v1657 = vextract.low.u32 %v1656
        %v1658 = vextract.high.u32 %v1656
        %v1659 = vmul.u32.u64.compose %v1655, %v1650
        %v1660 = vextract.low.u32 %v1659
        %v1661 = vextract.high.u32 %v1659
        %v1662 = vmul.u32 %v1655, %v1646
        %v1663 = vadd.s32 %v1658, %v1660
        %vm1664 = vc.u32 %v1658, %v1660
        %v1665 = vadd.s32 %v1661, 1
        %v1666 = vsel %vm1664, %v1665, %v1661
        %v1667 = vadd.s32 %v1662, %v1666
        %v1668 = vadd.s32 %v1667, 536870912
        %v1669 = vshrl.u32 %v1668, 30
        %v1670 = vshll.u32 %v1669, 30
        %v1671 = vsub.s32 %v1667, %v1670
        %vm1672 = vcmp.lt.s32.totalorder %v1671, 0
        %v1673 = vsub.s32 0, %v1671
        %v1674 = vsel %vm1672, %v1673, %v1671
        %v1675 = vclz %v1674
        %v1676 = vsub.s32 %v1675, 2
        %vm1677 = vcmp.gt.s32.totalorder 0, %v1676
        %v1678 = vsel %vm1677, 0, %v1676
        %v1679 = vsub.s32 32, %v1678
        %v1680 = vshll.u32 %v1671, %v1678
        %v1681 = vshrl.u32 %v1663, %v1679
        %v1682 = vor.u32 %v1680, %v1681
        %v1683 = vsub.s32 4294967266, %v1678
        %v1684 = vadd.s32 %v1683, 127
        %v1685 = vshll.u32 %v1684, 23
        %v1686 = vor.u32 4788187, %v1685
        %v1687 = vand.u32 2147483647, %v1686
        %v1689 = vcvt.s32.f32 %v1682
        %v1690 = vmul.f32 %v1689, %v1687
        %v1691 = vxor.u32 %v1690, 2147483648
        %v1692 = vsel %vm1609, %v1691, %v1690
        %v1693 = vsub.s32 4, %v1669
        %v1694 = vsel %vm1609, %v1693, %v1669
        %v1695 = vsel %vm1608, %v1594, %v1692
        %v1696 = vsel %vm1608, 0, %v1694
        %v1697 = vcosq.f32.pop %v1695
        %v1698 = vsinq.f32.pop %v1695
        %vm1699 = vweird.f32 %v1594
        %v1700 = vadd.s32 %v1696, 3
        %v1701 = vand.u32 %v1700, 3
        %vm1702 = vcmp.lt.s32.totalorder %v1701, 2
        %vm1703 = vcmp.eq.s32.totalorder %v1701, 0
        %v1704 = vxor.u32 %v1698, 2147483648
        %v1705 = vsel %vm1703, %v1697, %v1704
        %vm1706 = vcmp.eq.s32.totalorder %v1701, 2
        %v1707 = vxor.u32 %v1697, 2147483648
        %v1708 = vsel %vm1706, %v1707, %v1698
        %v1709 = vsel %vm1702, %v1705, %v1708
        %v1710 = vsel %vm1699, nan, %v1709
        %v1711 = vand.u32 2147483647, %v1599
        %vm1712 = vcmp.le.f32.partialorder %v1711, 0.7853982
        %vm1713 = vcmp.lt.s32.totalorder %v1599, 0
        %v1714 = vand.u32 %v1599, 2139095040
        %v1715 = vshrl.u32 %v1714, 23
        %v1716 = vsub.s32 %v1715, 127
        %v1717 = vand.u32 2147483647, %v1599
        %v1718 = vand.u32 %v1717, 8388607
        %v1719 = vor.u32 %v1718, 8388608
        %v1720 = vsub.s32 0, %v1719
        %v1721 = vadd.s32 %v1716, 1
        %vm1722 = vcmp.gt.s32.totalorder %v1721, 0
        %v1723 = vsel %vm1722, %v1721, 0
        %v1724 = vshrl.u32 %v1723, 5
        %v1725 = vand.u32 %v1723, 31
        %v1726 = vsub.s32 32, %v1725
        %v1727 = vshrl.u32 683565275, %v1726
        %v1728 = vshll.u32 683565275, %v1725
        %v1729 = vshrl.u32 2475754826, %v1726
        %v1730 = vor.u32 %v1728, %v1729
        %v1731 = vshll.u32 2475754826, %v1725
        %v1732 = vshrl.u32 2131351028, %v1726
        %v1733 = vor.u32 %v1731, %v1732
        %v1734 = vshll.u32 2131351028, %v1725
        %v1735 = vshrl.u32 2102212464, %v1726
        %v1736 = vor.u32 %v1734, %v1735
        %v1737 = vshll.u32 2102212464, %v1725
        %v1738 = vshrl.u32 920167782, %v1726
        %v1739 = vor.u32 %v1737, %v1738
        %v1740 = vshll.u32 920167782, %v1725
        %v1741 = vshrl.u32 1326507024, %v1726
        %v1742 = vor.u32 %v1740, %v1741
        %vm1743 = vcmp.lt.s32.totalorder %v1724, 1
        %vm1744 = vcmp.lt.s32.totalorder %v1724, 2
        %vm1745 = vcmp.lt.s32.totalorder %v1724, 3
        %vm1746 = vcmp.lt.s32.totalorder %v1724, 4
        %v1747 = vsel %vm1743, %v1727, %v1730
        %v1748 = vsel %vm1746, %v1736, 2102212464
        %v1749 = vsel %vm1745, %v1733, %v1748
        %v1750 = vsel %vm1744, %v1747, %v1749
        %v1751 = vsel %vm1743, %v1730, %v1733
        %v1752 = vsel %vm1746, %v1739, 920167782
        %v1753 = vsel %vm1745, %v1736, %v1752
        %v1754 = vsel %vm1744, %v1751, %v1753
        %v1755 = vsel %vm1743, %v1733, %v1736
        %v1756 = vsel %vm1746, %v1742, 1326507024
        %v1757 = vsel %vm1745, %v1739, %v1756
        %v1758 = vsel %vm1744, %v1755, %v1757
        %v1759 = vshll.u32 %v1719, 8
        %v1760 = vmul.u32.u64.compose %v1759, %v1758
        %v1761 = vextract.low.u32 %v1760
        %v1762 = vextract.high.u32 %v1760
        %v1763 = vmul.u32.u64.compose %v1759, %v1754
        %v1764 = vextract.low.u32 %v1763
        %v1765 = vextract.high.u32 %v1763
        %v1766 = vmul.u32 %v1759, %v1750
        %v1767 = vadd.s32 %v1762, %v1764
        %vm1768 = vc.u32 %v1762, %v1764
        %v1769 = vadd.s32 %v1765, 1
        %v1770 = vsel %vm1768, %v1769, %v1765
        %v1771 = vadd.s32 %v1766, %v1770
        %v1772 = vadd.s32 %v1771, 536870912
        %v1773 = vshrl.u32 %v1772, 30
        %v1774 = vshll.u32 %v1773, 30
        %v1775 = vsub.s32 %v1771, %v1774
        %vm1776 = vcmp.lt.s32.totalorder %v1775, 0
        %v1777 = vsub.s32 0, %v1775
        %v1778 = vsel %vm1776, %v1777, %v1775
        %v1779 = vclz %v1778
        %v1780 = vsub.s32 %v1779, 2
        %vm1781 = vcmp.gt.s32.totalorder 0, %v1780
        %v1782 = vsel %vm1781, 0, %v1780
        %v1783 = vsub.s32 32, %v1782
        %v1784 = vshll.u32 %v1775, %v1782
        %v1785 = vshrl.u32 %v1767, %v1783
        %v1786 = vor.u32 %v1784, %v1785
        %v1787 = vsub.s32 4294967266, %v1782
        %v1788 = vadd.s32 %v1787, 127
        %v1789 = vshll.u32 %v1788, 23
        %v1790 = vor.u32 4788187, %v1789
        %v1791 = vand.u32 2147483647, %v1790
        %v1793 = vcvt.s32.f32 %v1786
        %v1794 = vmul.f32 %v1793, %v1791
        %v1795 = vxor.u32 %v1794, 2147483648
        %v1796 = vsel %vm1713, %v1795, %v1794
        %v1797 = vsub.s32 4, %v1773
        %v1798 = vsel %vm1713, %v1797, %v1773
        %v1799 = vsel %vm1712, %v1599, %v1796
        %v1800 = vsel %vm1712, 0, %v1798
        %v1801 = vcosq.f32.pop %v1799
        %v1802 = vsinq.f32.pop %v1799
        %vm1803 = vweird.f32 %v1599
        %v1804 = vadd.s32 %v1800, 3
        %v1805 = vand.u32 %v1804, 3
        %vm1806 = vcmp.lt.s32.totalorder %v1805, 2
        %vm1807 = vcmp.eq.s32.totalorder %v1805, 0
        %v1808 = vxor.u32 %v1802, 2147483648
        %v1809 = vsel %vm1807, %v1801, %v1808
        %vm1810 = vcmp.eq.s32.totalorder %v1805, 2
        %v1811 = vxor.u32 %v1801, 2147483648
        %v1812 = vsel %vm1810, %v1811, %v1802
        %v1813 = vsel %vm1806, %v1809, %v1812
        %v1814 = vsel %vm1803, nan, %v1813
        %v1815 = vand.u32 2147483647, %v1604
        %vm1816 = vcmp.le.f32.partialorder %v1815, 0.7853982
        %vm1817 = vcmp.lt.s32.totalorder %v1604, 0
        %v1818 = vand.u32 %v1604, 2139095040
        %v1819 = vshrl.u32 %v1818, 23
        %v1820 = vsub.s32 %v1819, 127
        %v1821 = vand.u32 2147483647, %v1604
        %v1822 = vand.u32 %v1821, 8388607
        %v1823 = vor.u32 %v1822, 8388608
        %v1824 = vsub.s32 0, %v1823
        %v1825 = vadd.s32 %v1820, 1
        %vm1826 = vcmp.gt.s32.totalorder %v1825, 0
        %v1827 = vsel %vm1826, %v1825, 0
        %v1828 = vshrl.u32 %v1827, 5
        %v1829 = vand.u32 %v1827, 31
        %v1830 = vsub.s32 32, %v1829
        %v1831 = vshrl.u32 683565275, %v1830
        %v1832 = vshll.u32 683565275, %v1829
        %v1833 = vshrl.u32 2475754826, %v1830
        %v1834 = vor.u32 %v1832, %v1833
        %v1835 = vshll.u32 2475754826, %v1829
        %v1836 = vshrl.u32 2131351028, %v1830
        %v1837 = vor.u32 %v1835, %v1836
        %v1838 = vshll.u32 2131351028, %v1829
        %v1839 = vshrl.u32 2102212464, %v1830
        %v1840 = vor.u32 %v1838, %v1839
        %v1841 = vshll.u32 2102212464, %v1829
        %v1842 = vshrl.u32 920167782, %v1830
        %v1843 = vor.u32 %v1841, %v1842
        %v1844 = vshll.u32 920167782, %v1829
        %v1845 = vshrl.u32 1326507024, %v1830
        %v1846 = vor.u32 %v1844, %v1845
        %vm1847 = vcmp.lt.s32.totalorder %v1828, 1
        %vm1848 = vcmp.lt.s32.totalorder %v1828, 2
        %vm1849 = vcmp.lt.s32.totalorder %v1828, 3
        %vm1850 = vcmp.lt.s32.totalorder %v1828, 4
        %v1851 = vsel %vm1847, %v1831, %v1834
        %v1852 = vsel %vm1850, %v1840, 2102212464
        %v1853 = vsel %vm1849, %v1837, %v1852
        %v1854 = vsel %vm1848, %v1851, %v1853
        %v1855 = vsel %vm1847, %v1834, %v1837
        %v1856 = vsel %vm1850, %v1843, 920167782
        %v1857 = vsel %vm1849, %v1840, %v1856
        %v1858 = vsel %vm1848, %v1855, %v1857
        %v1859 = vsel %vm1847, %v1837, %v1840
        %v1860 = vsel %vm1850, %v1846, 1326507024
        %v1861 = vsel %vm1849, %v1843, %v1860
        %v1862 = vsel %vm1848, %v1859, %v1861
        %v1863 = vshll.u32 %v1823, 8
        %v1864 = vmul.u32.u64.compose %v1863, %v1862
        %v1865 = vextract.low.u32 %v1864
        %v1866 = vextract.high.u32 %v1864
        %v1867 = vmul.u32.u64.compose %v1863, %v1858
        %v1868 = vextract.low.u32 %v1867
        %v1869 = vextract.high.u32 %v1867
        %v1870 = vmul.u32 %v1863, %v1854
        %v1871 = vadd.s32 %v1866, %v1868
        %vm1872 = vc.u32 %v1866, %v1868
        %v1873 = vadd.s32 %v1869, 1
        %v1874 = vsel %vm1872, %v1873, %v1869
        %v1875 = vadd.s32 %v1870, %v1874
        %v1876 = vadd.s32 %v1875, 536870912
        %v1877 = vshrl.u32 %v1876, 30
        %v1878 = vshll.u32 %v1877, 30
        %v1879 = vsub.s32 %v1875, %v1878
        %vm1880 = vcmp.lt.s32.totalorder %v1879, 0
        %v1881 = vsub.s32 0, %v1879
        %v1882 = vsel %vm1880, %v1881, %v1879
        %v1883 = vclz %v1882
        %v1884 = vsub.s32 %v1883, 2
        %vm1885 = vcmp.gt.s32.totalorder 0, %v1884
        %v1886 = vsel %vm1885, 0, %v1884
        %v1887 = vsub.s32 32, %v1886
        %v1888 = vshll.u32 %v1879, %v1886
        %v1889 = vshrl.u32 %v1871, %v1887
        %v1890 = vor.u32 %v1888, %v1889
        %v1891 = vsub.s32 4294967266, %v1886
        %v1892 = vadd.s32 %v1891, 127
        %v1893 = vshll.u32 %v1892, 23
        %v1894 = vor.u32 4788187, %v1893
        %v1895 = vand.u32 2147483647, %v1894
        %v1897 = vcvt.s32.f32 %v1890
        %v1898 = vmul.f32 %v1897, %v1895
        %v1899 = vxor.u32 %v1898, 2147483648
        %v1900 = vsel %vm1817, %v1899, %v1898
        %v1901 = vsub.s32 4, %v1877
        %v1902 = vsel %vm1817, %v1901, %v1877
        %v1903 = vsel %vm1816, %v1604, %v1900
        %v1904 = vsel %vm1816, 0, %v1902
        %v1905 = vcosq.f32.pop %v1903
        %v1906 = vsinq.f32.pop %v1903
        %vm1907 = vweird.f32 %v1604
        %v1908 = vadd.s32 %v1904, 3
        %v1909 = vand.u32 %v1908, 3
        %vm1910 = vcmp.lt.s32.totalorder %v1909, 2
        %vm1911 = vcmp.eq.s32.totalorder %v1909, 0
        %v1912 = vxor.u32 %v1906, 2147483648
        %v1913 = vsel %vm1911, %v1905, %v1912
        %vm1914 = vcmp.eq.s32.totalorder %v1909, 2
        %v1915 = vxor.u32 %v1905, 2147483648
        %v1916 = vsel %vm1914, %v1915, %v1906
        %v1917 = vsel %vm1910, %v1913, %v1916
        %v1918 = vsel %vm1907, nan, %v1917
        %v1919 = vmul.f32 %v1710, 0.33333334
        %v1920 = vmul.f32 %v1814, 0.33333334
        %v1921 = vmul.f32 %v1918, 0.33333334
        %v1922 = vadd.f32 %v1499, %v1919
        %v1923 = vadd.f32 %v1500, %v1920
        %v1924 = vadd.f32 %v1501, %v1921
        %1925 = vst [vmem:[%s233] sm:$0xff] %v1922
        %1926 = vst [vmem:[%s233 + $0x8] sm:$0xff] %v1923
        %1927 = vst [vmem:[%s233 + $0x10] sm:$0xff] %v1924
        %s1928 = sand.u32 %s138, 1
        %s1929 = scalar_lea.sflag [#allocation4], %s1928
        %s1930 = sand.u32 %s138, 1
        %s1931 = smul.addr %s1930, 24
        %s1932 = scalar_lea.vmem [#allocation5], %s1931
        // Predicated region
        $region45: #{tpu_custom_call.1} parent=39 // pred_check
          %p1933 = pneg %p148
        $region46: #{tpu_custom_call.1} parent=39 // pred_check_branch
          %1935 = sbr.rel (%p1933) target = $region48
        $region47: #{tpu_custom_call.1} parent=39 // pred_region
          %s1936 = smul.u32 3, %s20
          %s1938 = ssub.s32 384, 384
          %1939 = vsyncadd %s1929, %s1938
          %s1940 = smul.addr %s1936, 128
          %s1941 = scalar_lea.hbm %s5, %s1940
          %s1942 = sshll.u32 %s1932, 4
          %s1943 = int_to_ptr.vmem [resolvable:$true] %s1942
          %1948 = dma.vmem_to_hbm [thread:$0]  %s1943, 384, %s1941, %s1929, 128, 128, 8
        $region48: #{tpu_custom_call.1} parent=39 // pred_fallthru
          _
      $region40: #{tpu_custom_call.1} parent=5 // pred_fallthru
        _
      %p1949 = scmp.le.s32.totalorder 2, %s15
      // Predicated region
      $region49: #{tpu_custom_call.1} parent=5 // pred_check
        %p1950 = pneg %p1949
      $region50: #{tpu_custom_call.1} parent=5 // pred_check_branch
        %1952 = sbr.rel (%p1950) target = $region52
      $region51: #{tpu_custom_call.1} parent=5 // pred_region
        %s1953 = ssub.s32 %s15, 2
        // Predicated region
        $region53: #{tpu_custom_call.1} parent=51 // pred_check
          %p1954 = pneg %p154
        $region54: #{tpu_custom_call.1} parent=51 // pred_check_branch
          %1956 = sbr.rel (%p1954) target = $region56
        $region55: #{tpu_custom_call.1} parent=51 // pred_region
          %s1957 = sand.u32 %s139, 1
          %s1958 = scalar_lea.sflag [#allocation4], %s1957
          %s1959 = sand.u32 %s139, 1
          %s1960 = smul.addr %s1959, 24
          %s1961 = scalar_lea.vmem [#allocation5], %s1960
          %1962 = dma.done %s1958, 384
        $region56: #{tpu_custom_call.1} parent=51 // pred_fallthru
          _
      $region52: #{tpu_custom_call.1} parent=5 // pred_fallthru
        _
    $region6: #{tpu_custom_call.1} parent=1 // loop_footer
      %s19 = sadd.s32 1, %s15
    $region7: #{tpu_custom_call.1} parent=1 // loop_footer_branch
      %14 = sbr.rel target = $region3
    $region8: #{tpu_custom_call.1} parent=1 // loop_exit
      _
    %1963 = vsyncpa [#allocation3], 1
    %s1964 = scalar_lea.sflag [#allocation3], 1
    %1965 = vsyncpa %s1964, 1
    %1966 = vsyncpa [#allocation4], 1
    %s1967 = scalar_lea.sflag [#allocation4], 1
    %1968 = vsyncpa %s1967, 1

</llo_original>
